<compile_context>
chip_gen: v7x
topology: tpu7x:2x2x1
jax: 0.10.0
libtpu: 0.0.40
codegen_flags: <defaults>
</compile_context>

<pallas_src>
import jax
import jax.numpy as jnp
import numpy as np
from jax.experimental import pallas as pl
from jax.experimental.pallas import tpu as pltpu

LANE = 128
ROW_TILE_CAP = 2048


# ---------------------------------------------------------------------------
# helpers
# ---------------------------------------------------------------------------
def _round_up(n, m):
    return ((n + m - 1) // m) * m


def _pad_lanes(x, width):
    """Zero-pad the last dim of x up to `width` (no-op if already that wide)."""
    pad = width - x.shape[-1]
    if pad == 0:
        return x
    return jnp.pad(x, [(0, 0)] * (x.ndim - 1) + [(0, pad)])


def _inverse_sigmoid_ref(x, eps=1e-5):
    x = jnp.clip(x, 0.0, 1.0)
    x1 = jnp.maximum(x, eps)
    x2 = jnp.maximum(1.0 - x, eps)
    return jnp.log(x1 / x2)


def _inverse_sigmoid_kernel(x, eps=1e-5):
    # log(x1) - log(x2): keeps the divide off the VALU (two EUP log pushes).
    x = jnp.clip(x, 0.0, 1.0)
    x1 = jnp.maximum(x, eps)
    x2 = jnp.maximum(1.0 - x, eps)
    return jnp.log(x1) - jnp.log(x2)


# ---------------------------------------------------------------------------
# fused kernel: grid (row_tiles, L); L innermost and sequential ("arbitrary")
# ---------------------------------------------------------------------------
def blumnet_fused_kernel(tok_ref,                 # (1, TM, D)   f32 (layer l tile)
                         bw1_ref, bb1_ref,        # (1, D, D) bf16, (1, 1, D) f32
                         bw2_ref, bb2_ref,        # (1, D, D) bf16, (1, 1, D) f32
                         bw3_ref, bb3_ref,        # (1, D, P2P) bf16, (1, 1, P2P) f32
                         h1w_ref, h1b_ref,        # (D, 128+D) bf16, (1, 128+D) f32
                         pw2_ref, pb2_ref,        # (D, D) bf16, (1, D) f32
                         pw3_ref, pb3_ref,        # (D, 128) bf16, (1, 128) f32
                         cbox_ref,                # (TM, P2P) f32  (ref_pts accumulator)
                         logit_ref,               # (TM, 128) f32  [ce|cpe|0] packed
                         pbox_ref):               # (TM, 128) f32
    l = pl.program_id(1)
    num_layers = pl.num_programs(1)

    # in-kernel bf16 cast of the f32 token tile (no wrapper-side astype pass)
    tok = tok_ref[0].astype(jnp.bfloat16)                        # (TM, D)

    # per-layer bbox_embed 3-layer MLP -> refinement delta (f32 accumulation)
    h = jnp.dot(tok, bw1_ref[0], preferred_element_type=jnp.float32) + bb1_ref[0]
    h = jnp.maximum(h, 0.0).astype(jnp.bfloat16)
    h = jnp.dot(h, bw2_ref[0], preferred_element_type=jnp.float32) + bb2_ref[0]
    h = jnp.maximum(h, 0.0).astype(jnp.bfloat16)
    delta = jnp.dot(h, bw3_ref[0], preferred_element_type=jnp.float32) + bb3_ref[0]

    # iterative reference-point refinement; cbox_ref is the resident accumulator
    @pl.when(l == 0)
    def _():
        cbox_ref[...] = jax.nn.sigmoid(delta)

    @pl.when(l > 0)
    def _():
        cbox_ref[...] = jax.nn.sigmoid(delta + _inverse_sigmoid_kernel(cbox_ref[...]))

    # last layer: fused heads on the same (already loaded) token tile
    @pl.when(l == num_layers - 1)
    def _():
        # single matmul: [class_embed | class_pt_embed | pad] (128) + pt_embed L1 (D)
        h1 = jnp.dot(tok, h1w_ref[...], preferred_element_type=jnp.float32) + h1b_ref[...]
        logit_ref[...] = h1[:, :LANE]
        ph = jnp.maximum(h1[:, LANE:], 0.0).astype(jnp.bfloat16)
        ph = jnp.maximum(
            jnp.dot(ph, pw2_ref[...], preferred_element_type=jnp.float32) + pb2_ref[...],
            0.0).astype(jnp.bfloat16)
        pbox_ref[...] = jax.nn.sigmoid(
            jnp.dot(ph, pw3_ref[...], preferred_element_type=jnp.float32) + pb3_ref[...])


# ---------------------------------------------------------------------------
# wrapper
# ---------------------------------------------------------------------------
def blumnet_heads_pallas(hs, params, *, out_pts, num_queries):
    """hs: (L, B, Q, D) decoder hidden states; returns BlumNet output dict."""
    L, B, Q, D = hs.shape
    assert Q == num_queries + out_pts
    P2 = params["bbox_w3"].shape[-1]          # 2 * points_per_path
    P2P = _round_up(P2, LANE)                 # lane-dense curve-box width
    nce = params["ce_w"].shape[-1]            # class_embed cols (2)
    ncpe = params["cpe_w"].shape[-1]          # class_pt_embed cols (3)
    assert nce + ncpe <= LANE
    M = B * Q

    # row tiling: multiple of 8, capped; pad M up to a tile multiple so any
    # B*Q works (padded rows produce harmless values that are sliced away).
    TM = min(ROW_TILE_CAP, _round_up(M, 8))
    n_row_tiles = (M + TM - 1) // TM
    M_pad = n_row_tiles * TM

    # merge-only reshape; tokens stay f32, cast to bf16 inside the kernel.
    tokens = hs.reshape(L, M, D)
    if M_pad != M:
        tokens = jnp.pad(tokens, ((0, 0), (0, M_pad - M), (0, 0)))

    # bf16 weights, f32 biases; zero-pad narrow output dims to full lane groups.
    # NOTE: sliced outputs are exact only because padded columns are ZERO.
    bw1 = params["bbox_w1"].astype(jnp.bfloat16)                    # (L, D, D)
    bw2 = params["bbox_w2"].astype(jnp.bfloat16)                    # (L, D, D)
    bw3 = _pad_lanes(params["bbox_w3"], P2P).astype(jnp.bfloat16)   # (L, D, P2P)
    bb1 = params["bbox_b1"]                                         # (L, 1, D) f32
    bb2 = params["bbox_b2"]                                         # (L, 1, D) f32
    bb3 = _pad_lanes(params["bbox_b3"], P2P)                        # (L, 1, P2P) f32

    # fused last-layer head weights; ce + cpe packed into ONE 128-lane group.
    cls_w = jnp.concatenate([params["ce_w"], params["cpe_w"]], axis=1)   # (D, nce+ncpe)
    cls_b = jnp.concatenate([params["ce_b"], params["cpe_b"]], axis=1)   # (1, nce+ncpe)
    h1w = jnp.concatenate([_pad_lanes(cls_w, LANE), params["pe_w1"]],
                          axis=1).astype(jnp.bfloat16)                   # (D, 128+D)
    h1b = jnp.concatenate([_pad_lanes(cls_b, LANE), params["pe_b1"]], axis=1)  # (1, 128+D)
    pw2 = params["pe_w2"].astype(jnp.bfloat16)                      # (D, D)
    pb2 = params["pe_b2"]                                           # (1, D) f32
    pw3 = _pad_lanes(params["pe_w3"], LANE).astype(jnp.bfloat16)    # (D, 128)
    pb3 = _pad_lanes(params["pe_b3"], LANE)                         # (1, 128) f32

    out_shapes = (
        jax.ShapeDtypeStruct((M_pad, P2P), jnp.float32),   # curve boxes (padded)
        jax.ShapeDtypeStruct((M_pad, LANE), jnp.float32),  # packed logits (padded)
        jax.ShapeDtypeStruct((M_pad, LANE), jnp.float32),  # point boxes (padded)
    )

    cbox, logits, pbox = pl.pallas_call(
        blumnet_fused_kernel,
        out_shape=out_shapes,
        grid_spec=pltpu.PrefetchScalarGridSpec(
            num_scalar_prefetch=0,
            grid=(n_row_tiles, L),
            in_specs=[
                pl.BlockSpec((1, TM, D), lambda m, l: (l, m, 0)),     # tokens (layer l)
                pl.BlockSpec((1, D, D), lambda m, l: (l, 0, 0)),      # bbox w1
                pl.BlockSpec((1, 1, D), lambda m, l: (l, 0, 0)),      # bbox b1
                pl.BlockSpec((1, D, D), lambda m, l: (l, 0, 0)),      # bbox w2
                pl.BlockSpec((1, 1, D), lambda m, l: (l, 0, 0)),      # bbox b2
                pl.BlockSpec((1, D, P2P), lambda m, l: (l, 0, 0)),    # bbox w3
                pl.BlockSpec((1, 1, P2P), lambda m, l: (l, 0, 0)),    # bbox b3
                pl.BlockSpec((D, LANE + D), lambda m, l: (0, 0)),     # fused head w1
                pl.BlockSpec((1, LANE + D), lambda m, l: (0, 0)),     # fused head b1
                pl.BlockSpec((D, D), lambda m, l: (0, 0)),            # pt_embed w2
                pl.BlockSpec((1, D), lambda m, l: (0, 0)),            # pt_embed b2
                pl.BlockSpec((D, LANE), lambda m, l: (0, 0)),         # pt_embed w3
                pl.BlockSpec((1, LANE), lambda m, l: (0, 0)),         # pt_embed b3
            ],
            out_specs=[
                pl.BlockSpec((TM, P2P), lambda m, l: (m, 0)),
                pl.BlockSpec((TM, LANE), lambda m, l: (m, 0)),
                pl.BlockSpec((TM, LANE), lambda m, l: (m, 0)),
            ],
        ),
        compiler_params=pltpu.CompilerParams(
            dimension_semantics=("parallel", "arbitrary"),
            # explicit budget: above v5e's 16 MiB scoped default, below v7x's
            # 64 MiB physical, so the 2048-row tile compiles on all three gens.
            vmem_limit_bytes=48 * 1024 * 1024),
    )(tokens, bw1, bb1, bw2, bb2, bw3, bb3, h1w, h1b, pw2, pb2, pw3, pb3)

    # plain-JAX post-slice of the small padded outputs (cheap, lane-aligned)
    cbox = cbox[:M].reshape(B, Q, P2P)[:, out_pts:, :P2]
    logits = logits[:M].reshape(B, Q, LANE)
    clog = logits[:, out_pts:, :nce]
    plog = logits[:, :out_pts, nce:nce + ncpe]
    pbox = pbox[:M].reshape(B, Q, LANE)[:, :out_pts, :2]

    return {
        "curves": {"pred_logits": clog, "pred_boxes": cbox},
        "pts": {"pred_logits": plog, "pred_boxes": pbox},
    }


# ---------------------------------------------------------------------------
# plain-JAX reference (semantics of BlumNet.forward downstream of hs)
# ---------------------------------------------------------------------------
def blumnet_heads_ref(hs, params, *, out_pts, num_queries):
    L, B, Q, D = hs.shape

    def mlp3(x, w1, b1, w2, b2, w3, b3):
        h = jax.nn.relu(x @ w1 + b1)
        h = jax.nn.relu(h @ w2 + b2)
        return h @ w3 + b3

    curve0 = hs[0][:, out_pts:]
    ref_pts = jax.nn.sigmoid(
        mlp3(curve0, params["bbox_w1"][0], params["bbox_b1"][0],
             params["bbox_w2"][0], params["bbox_b2"][0],
             params["bbox_w3"][0], params["bbox_b3"][0]))
    for i in range(1, L):
        curve_i = hs[i][:, out_pts:]
        delta = mlp3(curve_i, params["bbox_w1"][i], params["bbox_b1"][i],
                     params["bbox_w2"][i], params["bbox_b2"][i],
                     params["bbox_w3"][i], params["bbox_b3"][i])
        ref_pts = jax.nn.sigmoid(delta + _inverse_sigmoid_ref(ref_pts))

    last = hs[-1]
    curve_hs = last[:, out_pts:]
    point_hs = last[:, :out_pts]
    curve_logits = curve_hs @ params["ce_w"] + params["ce_b"]
    point_logits = point_hs @ params["cpe_w"] + params["cpe_b"]
    point_boxes = jax.nn.sigmoid(
        mlp3(point_hs, params["pe_w1"], params["pe_b1"],
             params["pe_w2"], params["pe_b2"],
             params["pe_w3"], params["pe_b3"]))
    return {
        "curves": {"pred_logits": curve_logits, "pred_boxes": ref_pts},
        "pts": {"pred_logits": point_logits, "pred_boxes": point_boxes},
    }


# ---------------------------------------------------------------------------
# deterministic parameter init (shapes from BlumNet.__init__)
# ---------------------------------------------------------------------------
def init_params(key, *, hidden_dim, points_per_path, num_decoder_layers):
    D = hidden_dim
    P2 = 2 * points_per_path
    keys = jax.random.split(key, 32)
    ki = iter(keys)

    def linear(k, fan_in, fan_out):
        kw, kb = jax.random.split(k)
        bound = 1.0 / np.sqrt(fan_in)
        w = jax.random.uniform(kw, (fan_in, fan_out), jnp.float32, -bound, bound)
        b = jax.random.uniform(kb, (1, fan_out), jnp.float32, -bound, bound)
        return w, b

    bw1, bb1, bw2, bb2, bw3, bb3 = [], [], [], [], [], []
    for _ in range(num_decoder_layers):
        w, b = linear(next(ki), D, D); bw1.append(w); bb1.append(b)
        w, b = linear(next(ki), D, D); bw2.append(w); bb2.append(b)
        w, b = linear(next(ki), D, P2); bw3.append(w); bb3.append(b)

    ce_w, ce_b = linear(next(ki), D, 2)      # class_embed (num_classes=2)
    cpe_w, cpe_b = linear(next(ki), D, 3)    # class_pt_embed (num_classes+1)
    pe_w1, pe_b1 = linear(next(ki), D, D)    # pt_embed MLP(D, D, 2, 3 layers)
    pe_w2, pe_b2 = linear(next(ki), D, D)
    pe_w3, pe_b3 = linear(next(ki), D, 2)

    return {
        "bbox_w1": jnp.stack(bw1), "bbox_b1": jnp.stack(bb1),
        "bbox_w2": jnp.stack(bw2), "bbox_b2": jnp.stack(bb2),
        "bbox_w3": jnp.stack(bw3), "bbox_b3": jnp.stack(bb3),
        "ce_w": ce_w, "ce_b": ce_b,
        "cpe_w": cpe_w, "cpe_b": cpe_b,
        "pe_w1": pe_w1, "pe_b1": pe_b1,
        "pe_w2": pe_w2, "pe_b2": pe_b2,
        "pe_w3": pe_w3, "pe_b3": pe_b3,
    }


if __name__ == "__main__":
    # small config consistent with the module
    hidden_dim = 32          # d_model
    points_per_path = 2      # -> bbox head outputs 2*2 = 4
    out_pts = 4
    num_queries = 8
    num_decoder_layers = 3
    batch = 2
    Q_total = num_queries + out_pts

    key = jax.random.PRNGKey(0)
    k_hs, k_par = jax.random.split(key)

    # decoder hidden states (stand-in for HF deformable-DETR decoder output)
    hs = jax.random.normal(k_hs, (num_decoder_layers, batch, Q_total, hidden_dim),
                           dtype=jnp.float32)
    params = init_params(k_par, hidden_dim=hidden_dim,
                         points_per_path=points_per_path,
                         num_decoder_layers=num_decoder_layers)

    out = blumnet_heads_pallas(hs, params, out_pts=out_pts, num_queries=num_queries)
    out = jax.block_until_ready(out)

    # verify against plain-JAX f32 reference (kernel uses bf16 matmul inputs)
    ref = blumnet_heads_ref(hs, params, out_pts=out_pts, num_queries=num_queries)
    for grp in ("curves", "pts"):
        for name in ("pred_logits", "pred_boxes"):
            np.testing.assert_allclose(np.asarray(out[grp][name]),
                                       np.asarray(ref[grp][name]),
                                       rtol=2e-2, atol=2e-2)

    print("KERNEL_OK")
</pallas_src>

<mosaic_0001>
module attributes {stable_mosaic.version = 11 : i64} {
  func.func @blumnet_fused_kernel(%arg0: i32, %arg1: i32, %arg2: memref<1x24x32xf32, #tpu.memory_space<vmem>>, %arg3: memref<1x32x32xbf16, #tpu.memory_space<vmem>>, %arg4: memref<1x1x32xf32, #tpu.memory_space<vmem>>, %arg5: memref<1x32x32xbf16, #tpu.memory_space<vmem>>, %arg6: memref<1x1x32xf32, #tpu.memory_space<vmem>>, %arg7: memref<1x32x128xbf16, #tpu.memory_space<vmem>>, %arg8: memref<1x1x128xf32, #tpu.memory_space<vmem>>, %arg9: memref<32x160xbf16, #tpu.memory_space<vmem>>, %arg10: memref<1x160xf32, #tpu.memory_space<vmem>>, %arg11: memref<32x32xbf16, #tpu.memory_space<vmem>>, %arg12: memref<1x32xf32, #tpu.memory_space<vmem>>, %arg13: memref<32x128xbf16, #tpu.memory_space<vmem>>, %arg14: memref<1x128xf32, #tpu.memory_space<vmem>>, %arg15: memref<24x128xf32, #tpu.memory_space<vmem>>, %arg16: memref<24x128xf32, #tpu.memory_space<vmem>>, %arg17: memref<24x128xf32, #tpu.memory_space<vmem>>) attributes {dimension_semantics = [#tpu.dimension_semantics<parallel>, #tpu.dimension_semantics<arbitrary>], iteration_bounds = array<i64: 1, 3>, scalar_prefetch = 0 : i64, scratch_operands = 0 : i64, tpu.core_type = #tpu.core_type<tc>, window_params = [{transform_indices = @transform_0, window_bounds = array<i64: 1, 24, 32>}, {transform_indices = @transform_1, window_bounds = array<i64: 1, 32, 32>}, {transform_indices = @transform_2, window_bounds = array<i64: 1, 1, 32>}, {transform_indices = @transform_3, window_bounds = array<i64: 1, 32, 32>}, {transform_indices = @transform_4, window_bounds = array<i64: 1, 1, 32>}, {transform_indices = @transform_5, window_bounds = array<i64: 1, 32, 128>}, {transform_indices = @transform_6, window_bounds = array<i64: 1, 1, 128>}, {pipeline_mode = #tpu.pipeline_mode<synchronous>, transform_indices = @transform_7, window_bounds = array<i64: 32, 160>}, {pipeline_mode = #tpu.pipeline_mode<synchronous>, transform_indices = @transform_8, window_bounds = array<i64: 1, 160>}, {pipeline_mode = #tpu.pipeline_mode<synchronous>, transform_indices = @transform_9, window_bounds = array<i64: 32, 32>}, {pipeline_mode = #tpu.pipeline_mode<synchronous>, transform_indices = @transform_10, window_bounds = array<i64: 1, 32>}, {pipeline_mode = #tpu.pipeline_mode<synchronous>, transform_indices = @transform_11, window_bounds = array<i64: 32, 128>}, {pipeline_mode = #tpu.pipeline_mode<synchronous>, transform_indices = @transform_12, window_bounds = array<i64: 1, 128>}, {transform_indices = @transform_13, window_bounds = array<i64: 24, 128>}, {transform_indices = @transform_14, window_bounds = array<i64: 24, 128>}, {transform_indices = @transform_15, window_bounds = array<i64: 24, 128>}]} {
    %c0 = arith.constant 0 : index
    %c0_0 = arith.constant 0 : index
    %c0_1 = arith.constant 0 : index
    %0 = vector.load %arg2[%c0, %c0_0, %c0_1] : memref<1x24x32xf32, #tpu.memory_space<vmem>>, vector<1x24x32xf32>
    %1 = vector.shape_cast %0 : vector<1x24x32xf32> to vector<24x32xf32>
    %2 = arith.truncf %1 : vector<24x32xf32> to vector<24x32xbf16>
    %c0_2 = arith.constant 0 : index
    %c0_3 = arith.constant 0 : index
    %c0_4 = arith.constant 0 : index
    %3 = vector.load %arg3[%c0_2, %c0_3, %c0_4] : memref<1x32x32xbf16, #tpu.memory_space<vmem>>, vector<1x32x32xbf16>
    %4 = vector.shape_cast %3 : vector<1x32x32xbf16> to vector<32x32xbf16>
    %cst = arith.constant dense<0.000000e+00> : vector<24x32xf32>
    %5 = tpu.matmul %2, %4, %cst {dimension_numbers = #tpu.dot_dimension_numbers<[1], [0], [0], [1], [0, 0, 1, 1], [], []>} : vector<24x32xbf16>, vector<32x32xbf16>, vector<24x32xf32> -> vector<24x32xf32>
    %c0_5 = arith.constant 0 : index
    %c0_6 = arith.constant 0 : index
    %c0_7 = arith.constant 0 : index
    %6 = vector.load %arg4[%c0_5, %c0_6, %c0_7] : memref<1x1x32xf32, #tpu.memory_space<vmem>>, vector<1x1x32xf32>
    %7 = vector.shape_cast %6 : vector<1x1x32xf32> to vector<1x32xf32>
    %8 = vector.broadcast %7 : vector<1x32xf32> to vector<24x32xf32>
    %9 = arith.addf %5, %8 : vector<24x32xf32>
    %cst_8 = arith.constant 0.000000e+00 : f32
    %10 = vector.broadcast %cst_8 : f32 to vector<24x32xf32>
    %11 = arith.maximumf %9, %10 : vector<24x32xf32>
    %12 = arith.truncf %11 : vector<24x32xf32> to vector<24x32xbf16>
    %c0_9 = arith.constant 0 : index
    %c0_10 = arith.constant 0 : index
    %c0_11 = arith.constant 0 : index
    %13 = vector.load %arg5[%c0_9, %c0_10, %c0_11] : memref<1x32x32xbf16, #tpu.memory_space<vmem>>, vector<1x32x32xbf16>
    %14 = vector.shape_cast %13 : vector<1x32x32xbf16> to vector<32x32xbf16>
    %cst_12 = arith.constant dense<0.000000e+00> : vector<24x32xf32>
    %15 = tpu.matmul %12, %14, %cst_12 {dimension_numbers = #tpu.dot_dimension_numbers<[1], [0], [0], [1], [0, 0, 1, 1], [], []>} : vector<24x32xbf16>, vector<32x32xbf16>, vector<24x32xf32> -> vector<24x32xf32>
    %c0_13 = arith.constant 0 : index
    %c0_14 = arith.constant 0 : index
    %c0_15 = arith.constant 0 : index
    %16 = vector.load %arg6[%c0_13, %c0_14, %c0_15] : memref<1x1x32xf32, #tpu.memory_space<vmem>>, vector<1x1x32xf32>
    %17 = vector.shape_cast %16 : vector<1x1x32xf32> to vector<1x32xf32>
    %18 = vector.broadcast %17 : vector<1x32xf32> to vector<24x32xf32>
    %19 = arith.addf %15, %18 : vector<24x32xf32>
    %cst_16 = arith.constant 0.000000e+00 : f32
    %20 = vector.broadcast %cst_16 : f32 to vector<24x32xf32>
    %21 = arith.maximumf %19, %20 : vector<24x32xf32>
    %22 = arith.truncf %21 : vector<24x32xf32> to vector<24x32xbf16>
    %c0_17 = arith.constant 0 : index
    %c0_18 = arith.constant 0 : index
    %c0_19 = arith.constant 0 : index
    %23 = vector.load %arg7[%c0_17, %c0_18, %c0_19] : memref<1x32x128xbf16, #tpu.memory_space<vmem>>, vector<1x32x128xbf16>
    %24 = vector.shape_cast %23 : vector<1x32x128xbf16> to vector<32x128xbf16>
    %cst_20 = arith.constant dense<0.000000e+00> : vector<24x128xf32>
    %25 = tpu.matmul %22, %24, %cst_20 {dimension_numbers = #tpu.dot_dimension_numbers<[1], [0], [0], [1], [0, 0, 1, 1], [], []>} : vector<24x32xbf16>, vector<32x128xbf16>, vector<24x128xf32> -> vector<24x128xf32>
    %c0_21 = arith.constant 0 : index
    %c0_22 = arith.constant 0 : index
    %c0_23 = arith.constant 0 : index
    %26 = vector.load %arg8[%c0_21, %c0_22, %c0_23] : memref<1x1x128xf32, #tpu.memory_space<vmem>>, vector<1x1x128xf32>
    %27 = vector.shape_cast %26 : vector<1x1x128xf32> to vector<1x128xf32>
    %28 = vector.broadcast %27 : vector<1x128xf32> to vector<24x128xf32>
    %29 = arith.addf %25, %28 : vector<24x128xf32>
    %c0_i32 = arith.constant 0 : i32
    %30 = arith.cmpi eq, %arg1, %c0_i32 : i32
    %31 = arith.extui %30 : i1 to i32
    %c0_i32_24 = arith.constant 0 : i32
    %32 = arith.cmpi ne, %31, %c0_i32_24 : i32
    scf.if %32 {
      %39 = arith.negf %29 : vector<24x128xf32>
      %40 = math.exp %39 : vector<24x128xf32>
      %cst_28 = arith.constant 1.000000e+00 : f32
      %41 = vector.broadcast %cst_28 : f32 to vector<24x128xf32>
      %42 = arith.addf %41, %40 : vector<24x128xf32>
      %43 = arith.divf %41, %42 : vector<24x128xf32>
      %c0_29 = arith.constant 0 : index
      %c0_30 = arith.constant 0 : index
      %44 = vector.load %arg15[%c0_29, %c0_30] : memref<24x128xf32, #tpu.memory_space<vmem>>, vector<24x128xf32>
      tpu.vector_store %arg15[%c0_29, %c0_30], %43 {strides = array<i32>} : memref<24x128xf32, #tpu.memory_space<vmem>>, vector<24x128xf32>,
    } else {
    }
    %c0_i32_25 = arith.constant 0 : i32
    %33 = arith.cmpi sgt, %arg1, %c0_i32_25 : i32
    %34 = arith.extui %33 : i1 to i32
    %c0_i32_26 = arith.constant 0 : i32
    %35 = arith.cmpi ne, %34, %c0_i32_26 : i32
    scf.if %35 {
      %c0_28 = arith.constant 0 : index
      %c0_29 = arith.constant 0 : index
      %39 = vector.load %arg15[%c0_28, %c0_29] : memref<24x128xf32, #tpu.memory_space<vmem>>, vector<24x128xf32>
      %cst_30 = arith.constant 0.000000e+00 : f32
      %cst_31 = arith.constant 1.000000e+00 : f32
      %40 = vector.broadcast %cst_30 : f32 to vector<24x128xf32>
      %41 = arith.maximumf %40, %39 : vector<24x128xf32>
      %42 = vector.broadcast %cst_31 : f32 to vector<24x128xf32>
      %43 = arith.minimumf %42, %41 : vector<24x128xf32>
      %cst_32 = arith.constant 9.99999974E-6 : f32
      %44 = vector.broadcast %cst_32 : f32 to vector<24x128xf32>
      %45 = arith.maximumf %43, %44 : vector<24x128xf32>
      %cst_33 = arith.constant 1.000000e+00 : f32
      %46 = vector.broadcast %cst_33 : f32 to vector<24x128xf32>
      %47 = arith.subf %46, %43 : vector<24x128xf32>
      %cst_34 = arith.constant 9.99999974E-6 : f32
      %48 = vector.broadcast %cst_34 : f32 to vector<24x128xf32>
      %49 = arith.maximumf %47, %48 : vector<24x128xf32>
      %50 = math.log %45 : vector<24x128xf32>
      %51 = math.log %49 : vector<24x128xf32>
      %52 = arith.subf %50, %51 : vector<24x128xf32>
      %53 = arith.addf %29, %52 : vector<24x128xf32>
      %54 = arith.negf %53 : vector<24x128xf32>
      %55 = math.exp %54 : vector<24x128xf32>
      %cst_35 = arith.constant 1.000000e+00 : f32
      %56 = vector.broadcast %cst_35 : f32 to vector<24x128xf32>
      %57 = arith.addf %56, %55 : vector<24x128xf32>
      %58 = arith.divf %56, %57 : vector<24x128xf32>
      %c0_36 = arith.constant 0 : index
      %c0_37 = arith.constant 0 : index
      %59 = vector.load %arg15[%c0_36, %c0_37] : memref<24x128xf32, #tpu.memory_space<vmem>>, vector<24x128xf32>
      tpu.vector_store %arg15[%c0_36, %c0_37], %58 {strides = array<i32>} : memref<24x128xf32, #tpu.memory_space<vmem>>, vector<24x128xf32>,
    } else {
    }
    %c2_i32 = arith.constant 2 : i32
    %36 = arith.cmpi eq, %arg1, %c2_i32 : i32
    %37 = arith.extui %36 : i1 to i32
    %c0_i32_27 = arith.constant 0 : i32
    %38 = arith.cmpi ne, %37, %c0_i32_27 : i32
    scf.if %38 {
      %c0_28 = arith.constant 0 : index
      %c0_29 = arith.constant 0 : index
      %39 = vector.load %arg9[%c0_28, %c0_29] : memref<32x160xbf16, #tpu.memory_space<vmem>>, vector<32x160xbf16>
      %cst_30 = arith.constant dense<0.000000e+00> : vector<24x160xf32>
      %40 = tpu.matmul %2, %39, %cst_30 {dimension_numbers = #tpu.dot_dimension_numbers<[1], [0], [0], [1], [0, 0, 1, 1], [], []>} : vector<24x32xbf16>, vector<32x160xbf16>, vector<24x160xf32> -> vector<24x160xf32>
      %c0_31 = arith.constant 0 : index
      %c0_32 = arith.constant 0 : index
      %41 = vector.load %arg10[%c0_31, %c0_32] : memref<1x160xf32, #tpu.memory_space<vmem>>, vector<1x160xf32>
      %42 = vector.broadcast %41 : vector<1x160xf32> to vector<24x160xf32>
      %43 = arith.addf %40, %42 : vector<24x160xf32>
      %44 = vector.extract_strided_slice %43 {offsets = [0, 0], sizes = [24, 128], strides = [1, 1]} : vector<24x160xf32> to vector<24x128xf32>
      %c0_33 = arith.constant 0 : index
      %c0_34 = arith.constant 0 : index
      %45 = vector.load %arg16[%c0_33, %c0_34] : memref<24x128xf32, #tpu.memory_space<vmem>>, vector<24x128xf32>
      tpu.vector_store %arg16[%c0_33, %c0_34], %44 {strides = array<i32>} : memref<24x128xf32, #tpu.memory_space<vmem>>, vector<24x128xf32>,
      %46 = vector.extract_strided_slice %43 {offsets = [0, 128], sizes = [24, 32], strides = [1, 1]} : vector<24x160xf32> to vector<24x32xf32>
      %cst_35 = arith.constant 0.000000e+00 : f32
      %47 = vector.broadcast %cst_35 : f32 to vector<24x32xf32>
      %48 = arith.maximumf %46, %47 : vector<24x32xf32>
      %49 = arith.truncf %48 : vector<24x32xf32> to vector<24x32xbf16>
      %c0_36 = arith.constant 0 : index
      %c0_37 = arith.constant 0 : index
      %50 = vector.load %arg11[%c0_36, %c0_37] : memref<32x32xbf16, #tpu.memory_space<vmem>>, vector<32x32xbf16>
      %cst_38 = arith.constant dense<0.000000e+00> : vector<24x32xf32>
      %51 = tpu.matmul %49, %50, %cst_38 {dimension_numbers = #tpu.dot_dimension_numbers<[1], [0], [0], [1], [0, 0, 1, 1], [], []>} : vector<24x32xbf16>, vector<32x32xbf16>, vector<24x32xf32> -> vector<24x32xf32>
      %c0_39 = arith.constant 0 : index
      %c0_40 = arith.constant 0 : index
      %52 = vector.load %arg12[%c0_39, %c0_40] : memref<1x32xf32, #tpu.memory_space<vmem>>, vector<1x32xf32>
      %53 = vector.broadcast %52 : vector<1x32xf32> to vector<24x32xf32>
      %54 = arith.addf %51, %53 : vector<24x32xf32>
      %cst_41 = arith.constant 0.000000e+00 : f32
      %55 = vector.broadcast %cst_41 : f32 to vector<24x32xf32>
      %56 = arith.maximumf %54, %55 : vector<24x32xf32>
      %57 = arith.truncf %56 : vector<24x32xf32> to vector<24x32xbf16>
      %c0_42 = arith.constant 0 : index
      %c0_43 = arith.constant 0 : index
      %58 = vector.load %arg13[%c0_42, %c0_43] : memref<32x128xbf16, #tpu.memory_space<vmem>>, vector<32x128xbf16>
      %cst_44 = arith.constant dense<0.000000e+00> : vector<24x128xf32>
      %59 = tpu.matmul %57, %58, %cst_44 {dimension_numbers = #tpu.dot_dimension_numbers<[1], [0], [0], [1], [0, 0, 1, 1], [], []>} : vector<24x32xbf16>, vector<32x128xbf16>, vector<24x128xf32> -> vector<24x128xf32>
      %c0_45 = arith.constant 0 : index
      %c0_46 = arith.constant 0 : index
      %60 = vector.load %arg14[%c0_45, %c0_46] : memref<1x128xf32, #tpu.memory_space<vmem>>, vector<1x128xf32>
      %61 = vector.broadcast %60 : vector<1x128xf32> to vector<24x128xf32>
      %62 = arith.addf %59, %61 : vector<24x128xf32>
      %63 = arith.negf %62 : vector<24x128xf32>
      %64 = math.exp %63 : vector<24x128xf32>
      %cst_47 = arith.constant 1.000000e+00 : f32
      %65 = vector.broadcast %cst_47 : f32 to vector<24x128xf32>
      %66 = arith.addf %65, %64 : vector<24x128xf32>
      %67 = arith.divf %65, %66 : vector<24x128xf32>
      %c0_48 = arith.constant 0 : index
      %c0_49 = arith.constant 0 : index
      %68 = vector.load %arg17[%c0_48, %c0_49] : memref<24x128xf32, #tpu.memory_space<vmem>>, vector<24x128xf32>
      tpu.vector_store %arg17[%c0_48, %c0_49], %67 {strides = array<i32>} : memref<24x128xf32, #tpu.memory_space<vmem>>, vector<24x128xf32>,
    } else {
    }
    return
  }
  func.func @transform_0(%arg0: i32, %arg1: i32) -> (i32, i32, i32) {
    %c0_i32 = arith.constant 0 : i32
    %c0_i32_0 = arith.constant 0 : i32
    return %arg1, %arg0, %c0_i32 : i32, i32, i32
  }
  func.func @transform_1(%arg0: i32, %arg1: i32) -> (i32, i32, i32) {
    %c0_i32 = arith.constant 0 : i32
    %c0_i32_0 = arith.constant 0 : i32
    %c0_i32_1 = arith.constant 0 : i32
    return %arg1, %c0_i32, %c0_i32_0 : i32, i32, i32
  }
  func.func @transform_2(%arg0: i32, %arg1: i32) -> (i32, i32, i32) {
    %c0_i32 = arith.constant 0 : i32
    %c0_i32_0 = arith.constant 0 : i32
    %c0_i32_1 = arith.constant 0 : i32
    return %arg1, %c0_i32, %c0_i32_0 : i32, i32, i32
  }
  func.func @transform_3(%arg0: i32, %arg1: i32) -> (i32, i32, i32) {
    %c0_i32 = arith.constant 0 : i32
    %c0_i32_0 = arith.constant 0 : i32
    %c0_i32_1 = arith.constant 0 : i32
    return %arg1, %c0_i32, %c0_i32_0 : i32, i32, i32
  }
  func.func @transform_4(%arg0: i32, %arg1: i32) -> (i32, i32, i32) {
    %c0_i32 = arith.constant 0 : i32
    %c0_i32_0 = arith.constant 0 : i32
    %c0_i32_1 = arith.constant 0 : i32
    return %arg1, %c0_i32, %c0_i32_0 : i32, i32, i32
  }
  func.func @transform_5(%arg0: i32, %arg1: i32) -> (i32, i32, i32) {
    %c0_i32 = arith.constant 0 : i32
    %c0_i32_0 = arith.constant 0 : i32
    %c0_i32_1 = arith.constant 0 : i32
    return %arg1, %c0_i32, %c0_i32_0 : i32, i32, i32
  }
  func.func @transform_6(%arg0: i32, %arg1: i32) -> (i32, i32, i32) {
    %c0_i32 = arith.constant 0 : i32
    %c0_i32_0 = arith.constant 0 : i32
    %c0_i32_1 = arith.constant 0 : i32
    return %arg1, %c0_i32, %c0_i32_0 : i32, i32, i32
  }
  func.func @transform_7(%arg0: i32, %arg1: i32) -> (i32, i32) {
    %c0_i32 = arith.constant 0 : i32
    %c0_i32_0 = arith.constant 0 : i32
    %c0_i32_1 = arith.constant 0 : i32
    return %c0_i32, %c0_i32_0 : i32, i32
  }
  func.func @transform_8(%arg0: i32, %arg1: i32) -> (i32, i32) {
    %c0_i32 = arith.constant 0 : i32
    %c0_i32_0 = arith.constant 0 : i32
    %c0_i32_1 = arith.constant 0 : i32
    return %c0_i32, %c0_i32_0 : i32, i32
  }
  func.func @transform_9(%arg0: i32, %arg1: i32) -> (i32, i32) {
    %c0_i32 = arith.constant 0 : i32
    %c0_i32_0 = arith.constant 0 : i32
    %c0_i32_1 = arith.constant 0 : i32
    return %c0_i32, %c0_i32_0 : i32, i32
  }
  func.func @transform_10(%arg0: i32, %arg1: i32) -> (i32, i32) {
    %c0_i32 = arith.constant 0 : i32
    %c0_i32_0 = arith.constant 0 : i32
    %c0_i32_1 = arith.constant 0 : i32
    return %c0_i32, %c0_i32_0 : i32, i32
  }
  func.func @transform_11(%arg0: i32, %arg1: i32) -> (i32, i32) {
    %c0_i32 = arith.constant 0 : i32
    %c0_i32_0 = arith.constant 0 : i32
    %c0_i32_1 = arith.constant 0 : i32
    return %c0_i32, %c0_i32_0 : i32, i32
  }
  func.func @transform_12(%arg0: i32, %arg1: i32) -> (i32, i32) {
    %c0_i32 = arith.constant 0 : i32
    %c0_i32_0 = arith.constant 0 : i32
    %c0_i32_1 = arith.constant 0 : i32
    return %c0_i32, %c0_i32_0 : i32, i32
  }
  func.func @transform_13(%arg0: i32, %arg1: i32) -> (i32, i32) {
    %c0_i32 = arith.constant 0 : i32
    %c0_i32_0 = arith.constant 0 : i32
    return %arg0, %c0_i32 : i32, i32
  }
  func.func @transform_14(%arg0: i32, %arg1: i32) -> (i32, i32) {
    %c0_i32 = arith.constant 0 : i32
    %c0_i32_0 = arith.constant 0 : i32
    return %arg0, %c0_i32 : i32, i32
  }
  func.func @transform_15(%arg0: i32, %arg1: i32) -> (i32, i32) {
    %c0_i32 = arith.constant 0 : i32
    %c0_i32_0 = arith.constant 0 : i32
    return %arg0, %c0_i32 : i32, i32
  }
}

</mosaic_0001>

<llo_original>
// kernel: tpu_custom_call.1
$region0: #{tpu_custom_call.1}
  #allocation0 [shape = 'u32[]', space=smem, size = 0x4, offset = 0x4, fixed_abs, tag = 'smem constant byte address 0x4 - core index']
  #allocation1 [shape = 'u32[144,128]{1,0:T(1,128)}', space=vmem, size = 0x12000, scoped, tag = 'internal scratch']
  %s0 = inlined_call_operand.hbm [shape: f32[3,24,32], index: 0, kind: input, shape index: {}]
  %s1 = inlined_call_operand.hbm [shape: bf16[3,32,32], index: 1, kind: input, shape index: {}]
  %s2 = inlined_call_operand.hbm [shape: f32[3,1,32], index: 2, kind: input, shape index: {}]
  %s3 = inlined_call_operand.hbm [shape: bf16[3,32,32], index: 3, kind: input, shape index: {}]
  %s4 = inlined_call_operand.hbm [shape: f32[3,1,32], index: 4, kind: input, shape index: {}]
  %s5 = inlined_call_operand.hbm [shape: bf16[3,32,128], index: 5, kind: input, shape index: {}]
  %s6 = inlined_call_operand.hbm [shape: f32[3,1,128], index: 6, kind: input, shape index: {}]
  %s7 = inlined_call_operand.hbm [shape: bf16[32,160], index: 7, kind: input, shape index: {}]
  %s8 = inlined_call_operand.vmem [shape: f32[1,160], index: 8, kind: input, shape index: {}]
  %s9 = inlined_call_operand.vmem [shape: bf16[32,32], index: 9, kind: input, shape index: {}]
  %s10 = inlined_call_operand.vmem [shape: f32[1,32], index: 10, kind: input, shape index: {}]
  %s11 = inlined_call_operand.vmem [shape: bf16[32,128], index: 11, kind: input, shape index: {}]
  %s12 = inlined_call_operand.vmem [shape: f32[1,128], index: 12, kind: input, shape index: {}]
  %s13 = inlined_call_operand.hbm [shape: f32[24,128], index: 13, kind: output, shape index: {0}]
  %s14 = inlined_call_operand.hbm [shape: f32[24,128], index: 14, kind: output, shape index: {1}]
  %s15 = inlined_call_operand.hbm [shape: f32[24,128], index: 15, kind: output, shape index: {2}]
  %16 = xla_tuple %s13, %s14, %s15
  %s17 = sld [smem:[#allocation0]]
  $region145: #{tpu_custom_call.1} parent=0
    _
  %s19 = ssub.s32 1, %s17
  %s20 = scalar_select 0, %s19, %s17
  $region1: #{tpu_custom_call.1} parent=0
    #allocation2 [shape = 'u8[24576]{0}', space=vmem, size = 0x6000, scoped, tag = 'input window, operand 0']
    #allocation3 [shape = 's32[2]{0}', space=sflag, size = 0x8, scoped, tag = 'scoped memory for tpu_custom_call.1']
    #allocation4 [shape = 's32[2]{0}', space=sflag, size = 0x8, scoped, tag = 'scoped memory for tpu_custom_call.1']
    #allocation5 [shape = 'u8[16384]{0}', space=vmem, size = 0x4000, scoped, tag = 'input window, operand 1']
    #allocation6 [shape = 's32[2]{0}', space=sflag, size = 0x8, scoped, tag = 'scoped memory for tpu_custom_call.1']
    #allocation7 [shape = 'u8[1024]{0}', space=vmem, size = 0x400, scoped, tag = 'input window, operand 2']
    #allocation8 [shape = 'u8[16384]{0}', space=vmem, size = 0x4000, scoped, tag = 'input window, operand 3']
    #allocation9 [shape = 's32[2]{0}', space=sflag, size = 0x8, scoped, tag = 'scoped memory for tpu_custom_call.1']
    #allocation10 [shape = 'u8[1024]{0}', space=vmem, size = 0x400, scoped, tag = 'input window, operand 4']
    #allocation11 [shape = 'u8[16384]{0}', space=vmem, size = 0x4000, scoped, tag = 'input window, operand 5']
    #allocation12 [shape = 's32[2]{0}', space=sflag, size = 0x8, scoped, tag = 'scoped memory for tpu_custom_call.1']
    #allocation13 [shape = 'u8[1024]{0}', space=vmem, size = 0x400, scoped, tag = 'input window, operand 6']
    #allocation14 [shape = 'u8[16384]{0}', space=vmem, size = 0x4000, scoped, tag = 'input window, operand 7, single buffered']
    #allocation15 [shape = 's32[1]{0}', space=sflag, size = 0x4, scoped, tag = 'scoped memory for tpu_custom_call.1']
    #allocation16 [shape = 'u8[12288]{0}', space=vmem, size = 0x3000, scoped, tag = 'output window, operand 0, single buffered']
    #allocation17 [shape = 'u8[12288]{0}', space=vmem, size = 0x3000, scoped, tag = 'output window, operand 1, single buffered']
    #allocation18 [shape = 's32[1]{0}', space=sflag, size = 0x4, scoped, tag = 'scoped memory for tpu_custom_call.1']
    #allocation19 [shape = 'u8[12288]{0}', space=vmem, size = 0x3000, scoped, tag = 'output window, operand 2, single buffered']
    %21 = vsyncpa [#allocation3], 0
    %s22 = scalar_lea.sflag [#allocation3], 1
    %23 = vsyncpa %s22, 0
    %24 = vsyncpa [#allocation6], 0
    %s25 = scalar_lea.sflag [#allocation6], 1
    %26 = vsyncpa %s25, 0
    %27 = vsyncpa [#allocation9], 0
    %s28 = scalar_lea.sflag [#allocation9], 1
    %29 = vsyncpa %s28, 0
    %30 = vsyncpa [#allocation12], 0
    %s31 = scalar_lea.sflag [#allocation12], 1
    %32 = vsyncpa %s31, 0
    %33 = vsyncpa [#allocation15], 0
    %34 = vsyncpa [#allocation4], 0
    %35 = vsyncpa [#allocation18], 0
    loop: start=0, step=1, limit=5
    $region2: #{tpu_custom_call.1} parent=1 // loop_pre_header
      _
    $region3: #{tpu_custom_call.1} parent=1 // loop_header
      %s37 = sphi 0, %s41
      %p38 = scmp.ge.s32.totalorder %s37, 5
      %s44 = sphi 0, %s56
      %s45 = sphi 0, %s52
      %s46 = sphi 0, %s44
      %s47 = sphi 0, %s45
      %s48 = sphi 0, %s46
      %s49 = sphi 0, %s47
      %s61 = sphi 0, %s63
      %s64 = sphi 0, %s61
      %s65 = sphi 0, %s64
      %s81 = sphi 0, %s65
      %s87 = sphi 0, %s89
      %s90 = sphi 0, %s87
      %s91 = sphi 0, %s90
      %s107 = sphi 0, %s91
      %s113 = sphi 0, %s115
      %s116 = sphi 0, %s113
      %s117 = sphi 0, %s116
      %s133 = sphi 0, %s117
      %s139 = sphi 0, %s141
      %s142 = sphi 0, %s139
      %s143 = sphi 0, %s142
      %s159 = sphi 0, %s143
      %s165 = sphi 0, %s167
      %s168 = sphi 0, %s165
      %s169 = sphi 0, %s168
      %s185 = sphi 0, %s169
      %s191 = sphi 0, %s193
      %s194 = sphi 0, %s191
      %s195 = sphi 0, %s194
      %s211 = sphi 0, %s195
      %s217 = sphi 0, %s219
      %s220 = sphi 0, %s217
      %s221 = sphi 0, %s220
      %s237 = sphi 0, %s221
      %s241 = sphi 0, %s241
      %s243 = sphi 0, %s241
      %s244 = sphi 0, %s243
      %s258 = sphi 0, %s244
      %s262 = sphi 0, %s262
      %s264 = sphi 0, %s262
      %s265 = sphi 0, %s264
      %s279 = sphi 0, %s265
      %s283 = sphi 0, %s283
      %s285 = sphi 0, %s283
      %s286 = sphi 0, %s285
      %s300 = sphi 0, %s286
      %s304 = sphi 0, %s304
      %s306 = sphi 0, %s304
      %s307 = sphi 0, %s306
      %s321 = sphi 0, %s307
      %s325 = sphi 0, %s325
      %s327 = sphi 0, %s325
      %s328 = sphi 0, %s327
      %s342 = sphi 0, %s328
      %s346 = sphi 0, %s346
      %s348 = sphi 0, %s346
      %s349 = sphi 0, %s348
      %s363 = sphi 0, %s349
      %s369 = sphi 0, %s371
      %s372 = sphi 0, %s369
      %s373 = sphi 0, %s372
      %s389 = sphi 0, %s373
      %s395 = sphi 0, %s397
      %s398 = sphi 0, %s395
      %s399 = sphi 0, %s398
      %s415 = sphi 0, %s399
      %s421 = sphi 0, %s423
      %s424 = sphi 0, %s421
      %s425 = sphi 0, %s424
      %s441 = sphi 0, %s425
    $region4: #{tpu_custom_call.1} parent=1 // loop_header_branch
      %40 = sbr.rel (%p38) target = $region8
    $region5: #{tpu_custom_call.1} parent=1 // loop_body
      %s42 = ssub.s32 %s37, 1
      %s43 = ssub.s32 %s37, 2
      %s50 = sadd.s32 1, %s45
      %p51 = scmp.ge.s32.totalorder %s50, 3
      %s52 = scalar_select %p51, 0, %s50
      %s53 = sadd.s32 1, %s44
      %s54 = scalar_select %p51, %s53, %s44
      %p55 = scmp.ge.s32.totalorder %s54, 1
      %s56 = scalar_select %p55, 0, %s54
      %s57 = ssub.s32 %s45, %s52
      %s58 = ssub.s32 %s44, %s56
      %s59 = sor.u32 %s57, %s58
      %p60 = scmp.eq.s32.totalorder %s59, 0
      %s62 = sadd.s32 %s61, 1
      %s63 = scalar_select %p60, %s61, %s62
      %p66 = pneg %p60
      %p67 = scmp.eq.s32.totalorder %s37, 2
      %p68 = por %p66, %p67
      %p69 = scmp.ne.s32.totalorder %s61, %s64
      %p70 = scmp.eq.s32.totalorder %s37, 0
      %p71 = por %p69, %p70
      %p72 = scmp.ne.s32.totalorder %s61, %s64
      %p73 = scmp.eq.s32.totalorder %s42, 2
      %p74 = por %p72, %p73
      %p75 = scmp.ne.s32.totalorder %s64, %s65
      %p76 = scmp.eq.s32.totalorder %s42, 0
      %p77 = por %p75, %p76
      %p78 = scmp.ne.s32.totalorder %s64, %s65
      %p79 = scmp.eq.s32.totalorder %s43, 2
      %p80 = por %p78, %p79
      %p82 = scmp.ne.s32.totalorder %s65, %s81
      %p83 = scmp.eq.s32.totalorder %s43, 0
      %p84 = por %p82, %p83
      %s85 = ssub.s32 %s45, %s52
      %p86 = scmp.eq.s32.totalorder %s85, 0
      %s88 = sadd.s32 %s87, 1
      %s89 = scalar_select %p86, %s87, %s88
      %p92 = pneg %p86
      %p93 = scmp.eq.s32.totalorder %s37, 2
      %p94 = por %p92, %p93
      %p95 = scmp.ne.s32.totalorder %s87, %s90
      %p96 = scmp.eq.s32.totalorder %s37, 0
      %p97 = por %p95, %p96
      %p98 = scmp.ne.s32.totalorder %s87, %s90
      %p99 = scmp.eq.s32.totalorder %s42, 2
      %p100 = por %p98, %p99
      %p101 = scmp.ne.s32.totalorder %s90, %s91
      %p102 = scmp.eq.s32.totalorder %s42, 0
      %p103 = por %p101, %p102
      %p104 = scmp.ne.s32.totalorder %s90, %s91
      %p105 = scmp.eq.s32.totalorder %s43, 2
      %p106 = por %p104, %p105
      %p108 = scmp.ne.s32.totalorder %s91, %s107
      %p109 = scmp.eq.s32.totalorder %s43, 0
      %p110 = por %p108, %p109
      %s111 = ssub.s32 %s45, %s52
      %p112 = scmp.eq.s32.totalorder %s111, 0
      %s114 = sadd.s32 %s113, 1
      %s115 = scalar_select %p112, %s113, %s114
      %p118 = pneg %p112
      %p119 = scmp.eq.s32.totalorder %s37, 2
      %p120 = por %p118, %p119
      %p121 = scmp.ne.s32.totalorder %s113, %s116
      %p122 = scmp.eq.s32.totalorder %s37, 0
      %p123 = por %p121, %p122
      %p124 = scmp.ne.s32.totalorder %s113, %s116
      %p125 = scmp.eq.s32.totalorder %s42, 2
      %p126 = por %p124, %p125
      %p127 = scmp.ne.s32.totalorder %s116, %s117
      %p128 = scmp.eq.s32.totalorder %s42, 0
      %p129 = por %p127, %p128
      %p130 = scmp.ne.s32.totalorder %s116, %s117
      %p131 = scmp.eq.s32.totalorder %s43, 2
      %p132 = por %p130, %p131
      %p134 = scmp.ne.s32.totalorder %s117, %s133
      %p135 = scmp.eq.s32.totalorder %s43, 0
      %p136 = por %p134, %p135
      %s137 = ssub.s32 %s45, %s52
      %p138 = scmp.eq.s32.totalorder %s137, 0
      %s140 = sadd.s32 %s139, 1
      %s141 = scalar_select %p138, %s139, %s140
      %p144 = pneg %p138
      %p145 = scmp.eq.s32.totalorder %s37, 2
      %p146 = por %p144, %p145
      %p147 = scmp.ne.s32.totalorder %s139, %s142
      %p148 = scmp.eq.s32.totalorder %s37, 0
      %p149 = por %p147, %p148
      %p150 = scmp.ne.s32.totalorder %s139, %s142
      %p151 = scmp.eq.s32.totalorder %s42, 2
      %p152 = por %p150, %p151
      %p153 = scmp.ne.s32.totalorder %s142, %s143
      %p154 = scmp.eq.s32.totalorder %s42, 0
      %p155 = por %p153, %p154
      %p156 = scmp.ne.s32.totalorder %s142, %s143
      %p157 = scmp.eq.s32.totalorder %s43, 2
      %p158 = por %p156, %p157
      %p160 = scmp.ne.s32.totalorder %s143, %s159
      %p161 = scmp.eq.s32.totalorder %s43, 0
      %p162 = por %p160, %p161
      %s163 = ssub.s32 %s45, %s52
      %p164 = scmp.eq.s32.totalorder %s163, 0
      %s166 = sadd.s32 %s165, 1
      %s167 = scalar_select %p164, %s165, %s166
      %p170 = pneg %p164
      %p171 = scmp.eq.s32.totalorder %s37, 2
      %p172 = por %p170, %p171
      %p173 = scmp.ne.s32.totalorder %s165, %s168
      %p174 = scmp.eq.s32.totalorder %s37, 0
      %p175 = por %p173, %p174
      %p176 = scmp.ne.s32.totalorder %s165, %s168
      %p177 = scmp.eq.s32.totalorder %s42, 2
      %p178 = por %p176, %p177
      %p179 = scmp.ne.s32.totalorder %s168, %s169
      %p180 = scmp.eq.s32.totalorder %s42, 0
      %p181 = por %p179, %p180
      %p182 = scmp.ne.s32.totalorder %s168, %s169
      %p183 = scmp.eq.s32.totalorder %s43, 2
      %p184 = por %p182, %p183
      %p186 = scmp.ne.s32.totalorder %s169, %s185
      %p187 = scmp.eq.s32.totalorder %s43, 0
      %p188 = por %p186, %p187
      %s189 = ssub.s32 %s45, %s52
      %p190 = scmp.eq.s32.totalorder %s189, 0
      %s192 = sadd.s32 %s191, 1
      %s193 = scalar_select %p190, %s191, %s192
      %p196 = pneg %p190
      %p197 = scmp.eq.s32.totalorder %s37, 2
      %p198 = por %p196, %p197
      %p199 = scmp.ne.s32.totalorder %s191, %s194
      %p200 = scmp.eq.s32.totalorder %s37, 0
      %p201 = por %p199, %p200
      %p202 = scmp.ne.s32.totalorder %s191, %s194
      %p203 = scmp.eq.s32.totalorder %s42, 2
      %p204 = por %p202, %p203
      %p205 = scmp.ne.s32.totalorder %s194, %s195
      %p206 = scmp.eq.s32.totalorder %s42, 0
      %p207 = por %p205, %p206
      %p208 = scmp.ne.s32.totalorder %s194, %s195
      %p209 = scmp.eq.s32.totalorder %s43, 2
      %p210 = por %p208, %p209
      %p212 = scmp.ne.s32.totalorder %s195, %s211
      %p213 = scmp.eq.s32.totalorder %s43, 0
      %p214 = por %p212, %p213
      %s215 = ssub.s32 %s45, %s52
      %p216 = scmp.eq.s32.totalorder %s215, 0
      %s218 = sadd.s32 %s217, 1
      %s219 = scalar_select %p216, %s217, %s218
      %p222 = pneg %p216
      %p223 = scmp.eq.s32.totalorder %s37, 2
      %p224 = por %p222, %p223
      %p225 = scmp.ne.s32.totalorder %s217, %s220
      %p226 = scmp.eq.s32.totalorder %s37, 0
      %p227 = por %p225, %p226
      %p228 = scmp.ne.s32.totalorder %s217, %s220
      %p229 = scmp.eq.s32.totalorder %s42, 2
      %p230 = por %p228, %p229
      %p231 = scmp.ne.s32.totalorder %s220, %s221
      %p232 = scmp.eq.s32.totalorder %s42, 0
      %p233 = por %p231, %p232
      %p234 = scmp.ne.s32.totalorder %s220, %s221
      %p235 = scmp.eq.s32.totalorder %s43, 2
      %p236 = por %p234, %p235
      %p238 = scmp.ne.s32.totalorder %s221, %s237
      %p239 = scmp.eq.s32.totalorder %s43, 0
      %p240 = por %p238, %p239
      %s242 = sadd.s32 %s241, 1
      %p245 = scmp.eq.s32.totalorder %s37, 2
      %p246 = scmp.ne.s32.totalorder %s241, %s243
      %p247 = scmp.eq.s32.totalorder %s37, 0
      %p248 = por %p246, %p247
      %p249 = scmp.ne.s32.totalorder %s241, %s243
      %p250 = scmp.eq.s32.totalorder %s42, 2
      %p251 = por %p249, %p250
      %p252 = scmp.ne.s32.totalorder %s243, %s244
      %p253 = scmp.eq.s32.totalorder %s42, 0
      %p254 = por %p252, %p253
      %p255 = scmp.ne.s32.totalorder %s243, %s244
      %p256 = scmp.eq.s32.totalorder %s43, 2
      %p257 = por %p255, %p256
      %p259 = scmp.ne.s32.totalorder %s244, %s258
      %p260 = scmp.eq.s32.totalorder %s43, 0
      %p261 = por %p259, %p260
      %s263 = sadd.s32 %s262, 1
      %p266 = scmp.eq.s32.totalorder %s37, 2
      %p267 = scmp.ne.s32.totalorder %s262, %s264
      %p268 = scmp.eq.s32.totalorder %s37, 0
      %p269 = por %p267, %p268
      %p270 = scmp.ne.s32.totalorder %s262, %s264
      %p271 = scmp.eq.s32.totalorder %s42, 2
      %p272 = por %p270, %p271
      %p273 = scmp.ne.s32.totalorder %s264, %s265
      %p274 = scmp.eq.s32.totalorder %s42, 0
      %p275 = por %p273, %p274
      %p276 = scmp.ne.s32.totalorder %s264, %s265
      %p277 = scmp.eq.s32.totalorder %s43, 2
      %p278 = por %p276, %p277
      %p280 = scmp.ne.s32.totalorder %s265, %s279
      %p281 = scmp.eq.s32.totalorder %s43, 0
      %p282 = por %p280, %p281
      %s284 = sadd.s32 %s283, 1
      %p287 = scmp.eq.s32.totalorder %s37, 2
      %p288 = scmp.ne.s32.totalorder %s283, %s285
      %p289 = scmp.eq.s32.totalorder %s37, 0
      %p290 = por %p288, %p289
      %p291 = scmp.ne.s32.totalorder %s283, %s285
      %p292 = scmp.eq.s32.totalorder %s42, 2
      %p293 = por %p291, %p292
      %p294 = scmp.ne.s32.totalorder %s285, %s286
      %p295 = scmp.eq.s32.totalorder %s42, 0
      %p296 = por %p294, %p295
      %p297 = scmp.ne.s32.totalorder %s285, %s286
      %p298 = scmp.eq.s32.totalorder %s43, 2
      %p299 = por %p297, %p298
      %p301 = scmp.ne.s32.totalorder %s286, %s300
      %p302 = scmp.eq.s32.totalorder %s43, 0
      %p303 = por %p301, %p302
      %s305 = sadd.s32 %s304, 1
      %p308 = scmp.eq.s32.totalorder %s37, 2
      %p309 = scmp.ne.s32.totalorder %s304, %s306
      %p310 = scmp.eq.s32.totalorder %s37, 0
      %p311 = por %p309, %p310
      %p312 = scmp.ne.s32.totalorder %s304, %s306
      %p313 = scmp.eq.s32.totalorder %s42, 2
      %p314 = por %p312, %p313
      %p315 = scmp.ne.s32.totalorder %s306, %s307
      %p316 = scmp.eq.s32.totalorder %s42, 0
      %p317 = por %p315, %p316
      %p318 = scmp.ne.s32.totalorder %s306, %s307
      %p319 = scmp.eq.s32.totalorder %s43, 2
      %p320 = por %p318, %p319
      %p322 = scmp.ne.s32.totalorder %s307, %s321
      %p323 = scmp.eq.s32.totalorder %s43, 0
      %p324 = por %p322, %p323
      %s326 = sadd.s32 %s325, 1
      %p329 = scmp.eq.s32.totalorder %s37, 2
      %p330 = scmp.ne.s32.totalorder %s325, %s327
      %p331 = scmp.eq.s32.totalorder %s37, 0
      %p332 = por %p330, %p331
      %p333 = scmp.ne.s32.totalorder %s325, %s327
      %p334 = scmp.eq.s32.totalorder %s42, 2
      %p335 = por %p333, %p334
      %p336 = scmp.ne.s32.totalorder %s327, %s328
      %p337 = scmp.eq.s32.totalorder %s42, 0
      %p338 = por %p336, %p337
      %p339 = scmp.ne.s32.totalorder %s327, %s328
      %p340 = scmp.eq.s32.totalorder %s43, 2
      %p341 = por %p339, %p340
      %p343 = scmp.ne.s32.totalorder %s328, %s342
      %p344 = scmp.eq.s32.totalorder %s43, 0
      %p345 = por %p343, %p344
      %s347 = sadd.s32 %s346, 1
      %p350 = scmp.eq.s32.totalorder %s37, 2
      %p351 = scmp.ne.s32.totalorder %s346, %s348
      %p352 = scmp.eq.s32.totalorder %s37, 0
      %p353 = por %p351, %p352
      %p354 = scmp.ne.s32.totalorder %s346, %s348
      %p355 = scmp.eq.s32.totalorder %s42, 2
      %p356 = por %p354, %p355
      %p357 = scmp.ne.s32.totalorder %s348, %s349
      %p358 = scmp.eq.s32.totalorder %s42, 0
      %p359 = por %p357, %p358
      %p360 = scmp.ne.s32.totalorder %s348, %s349
      %p361 = scmp.eq.s32.totalorder %s43, 2
      %p362 = por %p360, %p361
      %p364 = scmp.ne.s32.totalorder %s349, %s363
      %p365 = scmp.eq.s32.totalorder %s43, 0
      %p366 = por %p364, %p365
      %s367 = ssub.s32 %s44, %s56
      %p368 = scmp.eq.s32.totalorder %s367, 0
      %s370 = sadd.s32 %s369, 1
      %s371 = scalar_select %p368, %s369, %s370
      %p374 = pneg %p368
      %p375 = scmp.eq.s32.totalorder %s37, 2
      %p376 = por %p374, %p375
      %p377 = scmp.ne.s32.totalorder %s369, %s372
      %p378 = scmp.eq.s32.totalorder %s37, 0
      %p379 = por %p377, %p378
      %p380 = scmp.ne.s32.totalorder %s369, %s372
      %p381 = scmp.eq.s32.totalorder %s42, 2
      %p382 = por %p380, %p381
      %p383 = scmp.ne.s32.totalorder %s372, %s373
      %p384 = scmp.eq.s32.totalorder %s42, 0
      %p385 = por %p383, %p384
      %p386 = scmp.ne.s32.totalorder %s372, %s373
      %p387 = scmp.eq.s32.totalorder %s43, 2
      %p388 = por %p386, %p387
      %p390 = scmp.ne.s32.totalorder %s373, %s389
      %p391 = scmp.eq.s32.totalorder %s43, 0
      %p392 = por %p390, %p391
      %s393 = ssub.s32 %s44, %s56
      %p394 = scmp.eq.s32.totalorder %s393, 0
      %s396 = sadd.s32 %s395, 1
      %s397 = scalar_select %p394, %s395, %s396
      %p400 = pneg %p394
      %p401 = scmp.eq.s32.totalorder %s37, 2
      %p402 = por %p400, %p401
      %p403 = scmp.ne.s32.totalorder %s395, %s398
      %p404 = scmp.eq.s32.totalorder %s37, 0
      %p405 = por %p403, %p404
      %p406 = scmp.ne.s32.totalorder %s395, %s398
      %p407 = scmp.eq.s32.totalorder %s42, 2
      %p408 = por %p406, %p407
      %p409 = scmp.ne.s32.totalorder %s398, %s399
      %p410 = scmp.eq.s32.totalorder %s42, 0
      %p411 = por %p409, %p410
      %p412 = scmp.ne.s32.totalorder %s398, %s399
      %p413 = scmp.eq.s32.totalorder %s43, 2
      %p414 = por %p412, %p413
      %p416 = scmp.ne.s32.totalorder %s399, %s415
      %p417 = scmp.eq.s32.totalorder %s43, 0
      %p418 = por %p416, %p417
      %s419 = ssub.s32 %s44, %s56
      %p420 = scmp.eq.s32.totalorder %s419, 0
      %s422 = sadd.s32 %s421, 1
      %s423 = scalar_select %p420, %s421, %s422
      %p426 = pneg %p420
      %p427 = scmp.eq.s32.totalorder %s37, 2
      %p428 = por %p426, %p427
      %p429 = scmp.ne.s32.totalorder %s421, %s424
      %p430 = scmp.eq.s32.totalorder %s37, 0
      %p431 = por %p429, %p430
      %p432 = scmp.ne.s32.totalorder %s421, %s424
      %p433 = scmp.eq.s32.totalorder %s42, 2
      %p434 = por %p432, %p433
      %p435 = scmp.ne.s32.totalorder %s424, %s425
      %p436 = scmp.eq.s32.totalorder %s42, 0
      %p437 = por %p435, %p436
      %p438 = scmp.ne.s32.totalorder %s424, %s425
      %p439 = scmp.eq.s32.totalorder %s43, 2
      %p440 = por %p438, %p439
      %p442 = scmp.ne.s32.totalorder %s425, %s441
      %p443 = scmp.eq.s32.totalorder %s43, 0
      %p444 = por %p442, %p443
      %p445 = scmp.le.s32.totalorder 1, %s37
      %p446 = scmp.lt.s32.totalorder %s37, 4
      %p447 = pnand %p445, %p446
      %p448 = pneg %p447
      // Predicated region
      $region9: #{tpu_custom_call.1} parent=5 // pred_check
        _
      $region10: #{tpu_custom_call.1} parent=5 // pred_check_branch
        %450 = sbr.rel (%p447) target = $region12
      $region11: #{tpu_custom_call.1} parent=5 // pred_region
        %s451 = ssub.s32 %s37, 1
        // Predicated region
        $region13: #{tpu_custom_call.1} parent=11 // pred_check
          %p452 = pneg %p254
        $region14: #{tpu_custom_call.1} parent=11 // pred_check_branch
          %454 = sbr.rel (%p452) target = $region16
        $region15: #{tpu_custom_call.1} parent=11 // pred_region
          %s456 = ssub.s32 512, 512
          %457 = vsyncadd [#allocation15], %s456
          %s458 = sshll.u32 [#allocation14], 4
          %s459 = int_to_ptr.vmem [resolvable:$true] %s458
          %464 = dma.hbm_to_vmem [thread:$0]  %s7, 512, %s459, [#allocation15], 128, 128, 8
        $region16: #{tpu_custom_call.1} parent=11 // pred_fallthru
          _
        // Predicated region
        $region17: #{tpu_custom_call.1} parent=11 // pred_check
          %p465 = pneg %p275
        $region18: #{tpu_custom_call.1} parent=11 // pred_check_branch
          %467 = sbr.rel (%p465) target = $region20
        $region19: #{tpu_custom_call.1} parent=11 // pred_region
          _
        $region20: #{tpu_custom_call.1} parent=11 // pred_fallthru
          _
        // Predicated region
        $region21: #{tpu_custom_call.1} parent=11 // pred_check
          %p468 = pneg %p296
        $region22: #{tpu_custom_call.1} parent=11 // pred_check_branch
          %470 = sbr.rel (%p468) target = $region24
        $region23: #{tpu_custom_call.1} parent=11 // pred_region
          _
        $region24: #{tpu_custom_call.1} parent=11 // pred_fallthru
          _
        // Predicated region
        $region25: #{tpu_custom_call.1} parent=11 // pred_check
          %p471 = pneg %p317
        $region26: #{tpu_custom_call.1} parent=11 // pred_check_branch
          %473 = sbr.rel (%p471) target = $region28
        $region27: #{tpu_custom_call.1} parent=11 // pred_region
          _
        $region28: #{tpu_custom_call.1} parent=11 // pred_fallthru
          _
        // Predicated region
        $region29: #{tpu_custom_call.1} parent=11 // pred_check
          %p474 = pneg %p338
        $region30: #{tpu_custom_call.1} parent=11 // pred_check_branch
          %476 = sbr.rel (%p474) target = $region32
        $region31: #{tpu_custom_call.1} parent=11 // pred_region
          _
        $region32: #{tpu_custom_call.1} parent=11 // pred_fallthru
          _
        // Predicated region
        $region33: #{tpu_custom_call.1} parent=11 // pred_check
          %p477 = pneg %p359
        $region34: #{tpu_custom_call.1} parent=11 // pred_check_branch
          %479 = sbr.rel (%p477) target = $region36
        $region35: #{tpu_custom_call.1} parent=11 // pred_region
          _
        $region36: #{tpu_custom_call.1} parent=11 // pred_fallthru
          _
      $region12: #{tpu_custom_call.1} parent=5 // pred_fallthru
        _
      %p480 = scmp.lt.s32.totalorder %s37, 3
      // Predicated region
      $region37: #{tpu_custom_call.1} parent=5 // pred_check
        %p481 = pneg %p480
      $region38: #{tpu_custom_call.1} parent=5 // pred_check_branch
        %483 = sbr.rel (%p481) target = $region40
      $region39: #{tpu_custom_call.1} parent=5 // pred_region
        // Predicated region
        $region41: #{tpu_custom_call.1} parent=39 // pred_check
          %p484 = pneg %p71
        $region42: #{tpu_custom_call.1} parent=39 // pred_check_branch
          %486 = sbr.rel (%p484) target = $region44
        $region43: #{tpu_custom_call.1} parent=39 // pred_region
          %s487 = sand.u32 %s61, 1
          %s488 = scalar_lea.sflag [#allocation3], %s487
          %s489 = sand.u32 %s61, 1
          %s490 = smul.addr %s489, 24
          %s491 = scalar_lea.vmem [#allocation2], %s490
          %s492 = smul.u32 3, %s44
          %s494 = ssub.s32 384, 384
          %495 = vsyncadd %s488, %s494
          %s496 = smul.addr %s45, 3
          %s497 = sadd.s32 %s492, %s496
          %s498 = smul.addr %s497, 128
          %s499 = scalar_lea.hbm %s0, %s498
          %s500 = sshll.u32 %s491, 4
          %s501 = int_to_ptr.vmem [resolvable:$true] %s500
          %506 = dma.hbm_to_vmem [thread:$0]  %s499, 384, %s501, %s488, 128, 128, 8
        $region44: #{tpu_custom_call.1} parent=39 // pred_fallthru
          _
        // Predicated region
        $region45: #{tpu_custom_call.1} parent=39 // pred_check
          %p507 = pneg %p97
        $region46: #{tpu_custom_call.1} parent=39 // pred_check_branch
          %509 = sbr.rel (%p507) target = $region48
        $region47: #{tpu_custom_call.1} parent=39 // pred_region
          %s510 = sand.u32 %s37, 1
          %s511 = scalar_lea.sflag [#allocation6], %s510
          %s512 = sand.u32 %s87, 1
          %s513 = smul.addr %s512, 16
          %s514 = scalar_lea.vmem [#allocation5], %s513
          %s516 = ssub.s32 256, 256
          %517 = vsyncadd %s511, %s516
          %s518 = smul.addr %s45, 4
          %s519 = smul.addr %s518, 64
          %s520 = scalar_lea.hbm %s1, %s519
          %s521 = sshll.u32 %s514, 4
          %s522 = int_to_ptr.vmem [resolvable:$true] %s521
          %527 = dma.hbm_to_vmem [thread:$0]  %s520, 256, %s522, %s511, 64, 64, 4
        $region48: #{tpu_custom_call.1} parent=39 // pred_fallthru
          _
        // Predicated region
        $region49: #{tpu_custom_call.1} parent=39 // pred_check
          %p528 = pneg %p123
        $region50: #{tpu_custom_call.1} parent=39 // pred_check_branch
          %530 = sbr.rel (%p528) target = $region52
        $region51: #{tpu_custom_call.1} parent=39 // pred_region
          %s531 = sand.u32 %s37, 1
          %s532 = scalar_lea.sflag [#allocation6], %s531
          %s533 = sand.u32 %s113, 1
          %s534 = scalar_lea.vmem [#allocation7], %s533
          %s536 = ssub.s32 16, 16
          %537 = vsyncadd %s532, %s536
          %s538 = smul.addr %s45, 16
          %s539 = scalar_lea.hbm %s2, %s538
          %s541 = sshll.u32 %s534, 4
          %s542 = int_to_ptr.vmem [resolvable:$true] %s541
          %544 = dma.hbm_to_vmem [thread:$0]  %s539, 16, %s542, %s532
        $region52: #{tpu_custom_call.1} parent=39 // pred_fallthru
          _
        // Predicated region
        $region53: #{tpu_custom_call.1} parent=39 // pred_check
          %p545 = pneg %p149
        $region54: #{tpu_custom_call.1} parent=39 // pred_check_branch
          %547 = sbr.rel (%p545) target = $region56
        $region55: #{tpu_custom_call.1} parent=39 // pred_region
          %s548 = sand.u32 %s37, 1
          %s549 = scalar_lea.sflag [#allocation9], %s548
          %s550 = sand.u32 %s139, 1
          %s551 = smul.addr %s550, 16
          %s552 = scalar_lea.vmem [#allocation8], %s551
          %s554 = ssub.s32 256, 256
          %555 = vsyncadd %s549, %s554
          %s556 = smul.addr %s45, 4
          %s557 = smul.addr %s556, 64
          %s558 = scalar_lea.hbm %s3, %s557
          %s559 = sshll.u32 %s552, 4
          %s560 = int_to_ptr.vmem [resolvable:$true] %s559
          %565 = dma.hbm_to_vmem [thread:$0]  %s558, 256, %s560, %s549, 64, 64, 4
        $region56: #{tpu_custom_call.1} parent=39 // pred_fallthru
          _
        // Predicated region
        $region57: #{tpu_custom_call.1} parent=39 // pred_check
          %p566 = pneg %p175
        $region58: #{tpu_custom_call.1} parent=39 // pred_check_branch
          %568 = sbr.rel (%p566) target = $region60
        $region59: #{tpu_custom_call.1} parent=39 // pred_region
          %s569 = sand.u32 %s37, 1
          %s570 = scalar_lea.sflag [#allocation9], %s569
          %s571 = sand.u32 %s165, 1
          %s572 = scalar_lea.vmem [#allocation10], %s571
          %s574 = ssub.s32 16, 16
          %575 = vsyncadd %s570, %s574
          %s576 = smul.addr %s45, 16
          %s577 = scalar_lea.hbm %s4, %s576
          %s579 = sshll.u32 %s572, 4
          %s580 = int_to_ptr.vmem [resolvable:$true] %s579
          %582 = dma.hbm_to_vmem [thread:$0]  %s577, 16, %s580, %s570
        $region60: #{tpu_custom_call.1} parent=39 // pred_fallthru
          _
        // Predicated region
        $region61: #{tpu_custom_call.1} parent=39 // pred_check
          %p583 = pneg %p201
        $region62: #{tpu_custom_call.1} parent=39 // pred_check_branch
          %585 = sbr.rel (%p583) target = $region64
        $region63: #{tpu_custom_call.1} parent=39 // pred_region
          %s586 = sand.u32 %s37, 1
          %s587 = scalar_lea.sflag [#allocation12], %s586
          %s588 = sand.u32 %s191, 1
          %s589 = smul.addr %s588, 16
          %s590 = scalar_lea.vmem [#allocation11], %s589
          %s592 = ssub.s32 256, 256
          %593 = vsyncadd %s587, %s592
          %s594 = smul.addr %s45, 4
          %s595 = smul.addr %s594, 64
          %s596 = scalar_lea.hbm %s5, %s595
          %s597 = sshll.u32 %s590, 4
          %s598 = int_to_ptr.vmem [resolvable:$true] %s597
          %603 = dma.hbm_to_vmem [thread:$0]  %s596, 256, %s598, %s587, 64, 64, 4
        $region64: #{tpu_custom_call.1} parent=39 // pred_fallthru
          _
        // Predicated region
        $region65: #{tpu_custom_call.1} parent=39 // pred_check
          %p604 = pneg %p227
        $region66: #{tpu_custom_call.1} parent=39 // pred_check_branch
          %606 = sbr.rel (%p604) target = $region68
        $region67: #{tpu_custom_call.1} parent=39 // pred_region
          %s607 = sand.u32 %s37, 1
          %s608 = scalar_lea.sflag [#allocation12], %s607
          %s609 = sand.u32 %s217, 1
          %s610 = scalar_lea.vmem [#allocation13], %s609
          %s612 = ssub.s32 16, 16
          %613 = vsyncadd %s608, %s612
          %s614 = smul.addr %s45, 16
          %s615 = scalar_lea.hbm %s6, %s614
          %s617 = sshll.u32 %s610, 4
          %s618 = int_to_ptr.vmem [resolvable:$true] %s617
          %620 = dma.hbm_to_vmem [thread:$0]  %s615, 16, %s618, %s608
        $region68: #{tpu_custom_call.1} parent=39 // pred_fallthru
          _
      $region40: #{tpu_custom_call.1} parent=5 // pred_fallthru
        _
      %p621 = scmp.le.s32.totalorder 1, %s37
      %p622 = scmp.lt.s32.totalorder %s37, 4
      %p623 = pnand %p621, %p622
      %p624 = pneg %p623
      // Predicated region
      $region69: #{tpu_custom_call.1} parent=5 // pred_check
        _
      $region70: #{tpu_custom_call.1} parent=5 // pred_check_branch
        %626 = sbr.rel (%p623) target = $region72
      $region71: #{tpu_custom_call.1} parent=5 // pred_region
        %s627 = ssub.s32 %s37, 1
        %s628 = sand.u32 %s64, 1
        %s629 = scalar_lea.sflag [#allocation3], %s628
        %s630 = sand.u32 %s64, 1
        %s631 = smul.addr %s630, 24
        %s632 = scalar_lea.vmem [#allocation2], %s631
        // Predicated region
        $region73: #{tpu_custom_call.1} parent=71 // pred_check
          %p633 = pneg %p77
        $region74: #{tpu_custom_call.1} parent=71 // pred_check_branch
          %635 = sbr.rel (%p633) target = $region76
        $region75: #{tpu_custom_call.1} parent=71 // pred_region
          %636 = dma.done %s629, 384
        $region76: #{tpu_custom_call.1} parent=71 // pred_fallthru
          _
        %s637 = sand.u32 %s42, 1
        %s638 = scalar_lea.sflag [#allocation6], %s637
        %s639 = sand.u32 %s90, 1
        %s640 = smul.addr %s639, 16
        %s641 = scalar_lea.vmem [#allocation5], %s640
        // Predicated region
        $region77: #{tpu_custom_call.1} parent=71 // pred_check
          %p642 = pneg %p103
        $region78: #{tpu_custom_call.1} parent=71 // pred_check_branch
          %644 = sbr.rel (%p642) target = $region80
        $region79: #{tpu_custom_call.1} parent=71 // pred_region
          %645 = dma.done %s638, 256
        $region80: #{tpu_custom_call.1} parent=71 // pred_fallthru
          _
        %s646 = sand.u32 %s42, 1
        %s647 = scalar_lea.sflag [#allocation6], %s646
        %s648 = sand.u32 %s116, 1
        %s649 = scalar_lea.vmem [#allocation7], %s648
        // Predicated region
        $region81: #{tpu_custom_call.1} parent=71 // pred_check
          %p650 = pneg %p129
        $region82: #{tpu_custom_call.1} parent=71 // pred_check_branch
          %652 = sbr.rel (%p650) target = $region84
        $region83: #{tpu_custom_call.1} parent=71 // pred_region
          %653 = dma.done %s647, 16
        $region84: #{tpu_custom_call.1} parent=71 // pred_fallthru
          _
        %s654 = sand.u32 %s42, 1
        %s655 = scalar_lea.sflag [#allocation9], %s654
        %s656 = sand.u32 %s142, 1
        %s657 = smul.addr %s656, 16
        %s658 = scalar_lea.vmem [#allocation8], %s657
        // Predicated region
        $region85: #{tpu_custom_call.1} parent=71 // pred_check
          %p659 = pneg %p155
        $region86: #{tpu_custom_call.1} parent=71 // pred_check_branch
          %661 = sbr.rel (%p659) target = $region88
        $region87: #{tpu_custom_call.1} parent=71 // pred_region
          %662 = dma.done %s655, 256
        $region88: #{tpu_custom_call.1} parent=71 // pred_fallthru
          _
        %s663 = sand.u32 %s42, 1
        %s664 = scalar_lea.sflag [#allocation9], %s663
        %s665 = sand.u32 %s168, 1
        %s666 = scalar_lea.vmem [#allocation10], %s665
        // Predicated region
        $region89: #{tpu_custom_call.1} parent=71 // pred_check
          %p667 = pneg %p181
        $region90: #{tpu_custom_call.1} parent=71 // pred_check_branch
          %669 = sbr.rel (%p667) target = $region92
        $region91: #{tpu_custom_call.1} parent=71 // pred_region
          %670 = dma.done %s664, 16
        $region92: #{tpu_custom_call.1} parent=71 // pred_fallthru
          _
        %s671 = sand.u32 %s42, 1
        %s672 = scalar_lea.sflag [#allocation12], %s671
        %s673 = sand.u32 %s194, 1
        %s674 = smul.addr %s673, 16
        %s675 = scalar_lea.vmem [#allocation11], %s674
        // Predicated region
        $region93: #{tpu_custom_call.1} parent=71 // pred_check
          %p676 = pneg %p207
        $region94: #{tpu_custom_call.1} parent=71 // pred_check_branch
          %678 = sbr.rel (%p676) target = $region96
        $region95: #{tpu_custom_call.1} parent=71 // pred_region
          %679 = dma.done %s672, 256
        $region96: #{tpu_custom_call.1} parent=71 // pred_fallthru
          _
        %s680 = sand.u32 %s42, 1
        %s681 = scalar_lea.sflag [#allocation12], %s680
        %s682 = sand.u32 %s220, 1
        %s683 = scalar_lea.vmem [#allocation13], %s682
        // Predicated region
        $region97: #{tpu_custom_call.1} parent=71 // pred_check
          %p684 = pneg %p233
        $region98: #{tpu_custom_call.1} parent=71 // pred_check_branch
          %686 = sbr.rel (%p684) target = $region100
        $region99: #{tpu_custom_call.1} parent=71 // pred_region
          %687 = dma.done %s681, 16
        $region100: #{tpu_custom_call.1} parent=71 // pred_fallthru
          _
        // Predicated region
        $region101: #{tpu_custom_call.1} parent=71 // pred_check
          %p688 = pneg %p254
        $region102: #{tpu_custom_call.1} parent=71 // pred_check_branch
          %690 = sbr.rel (%p688) target = $region104
        $region103: #{tpu_custom_call.1} parent=71 // pred_region
          %691 = dma.done [#allocation15], 512
        $region104: #{tpu_custom_call.1} parent=71 // pred_fallthru
          _
        %s692 = sand.u32 %s64, 1
        %s693 = scalar_lea.sflag [#allocation3], %s692
        %s694 = sand.u32 %s64, 1
        %s695 = smul.addr %s694, 24
        %s696 = scalar_lea.vmem [#allocation2], %s695
        %p697 = pneg %p77
        %p698 = pneg %p74
        %s699 = sand.u32 %s42, 1
        %s700 = scalar_lea.sflag [#allocation6], %s699
        %s701 = sand.u32 %s90, 1
        %s702 = smul.addr %s701, 16
        %s703 = scalar_lea.vmem [#allocation5], %s702
        %p704 = pneg %p103
        %p705 = pneg %p100
        %s706 = sand.u32 %s42, 1
        %s707 = scalar_lea.sflag [#allocation6], %s706
        %s708 = sand.u32 %s116, 1
        %s709 = scalar_lea.vmem [#allocation7], %s708
        %p710 = pneg %p129
        %p711 = pneg %p126
        %s712 = sand.u32 %s42, 1
        %s713 = scalar_lea.sflag [#allocation9], %s712
        %s714 = sand.u32 %s142, 1
        %s715 = smul.addr %s714, 16
        %s716 = scalar_lea.vmem [#allocation8], %s715
        %p717 = pneg %p155
        %p718 = pneg %p152
        %s719 = sand.u32 %s42, 1
        %s720 = scalar_lea.sflag [#allocation9], %s719
        %s721 = sand.u32 %s168, 1
        %s722 = scalar_lea.vmem [#allocation10], %s721
        %p723 = pneg %p181
        %p724 = pneg %p178
        %s725 = sand.u32 %s42, 1
        %s726 = scalar_lea.sflag [#allocation12], %s725
        %s727 = sand.u32 %s194, 1
        %s728 = smul.addr %s727, 16
        %s729 = scalar_lea.vmem [#allocation11], %s728
        %p730 = pneg %p207
        %p731 = pneg %p204
        %s732 = sand.u32 %s42, 1
        %s733 = scalar_lea.sflag [#allocation12], %s732
        %s734 = sand.u32 %s220, 1
        %s735 = scalar_lea.vmem [#allocation13], %s734
        %p736 = pneg %p233
        %p737 = pneg %p230
        %p738 = pneg %p254
        %p739 = pneg %p251
        %p740 = pneg %p275
        %p741 = pneg %p272
        %p742 = pneg %p296
        %p743 = pneg %p293
        %p744 = pneg %p317
        %p745 = pneg %p314
        %p746 = pneg %p338
        %p747 = pneg %p335
        %p748 = pneg %p359
        %p749 = pneg %p356
        %p750 = pneg %p385
        %p751 = pneg %p382
        %p752 = pneg %p411
        %p753 = pneg %p408
        %p754 = pneg %p437
        %p755 = pneg %p434
        %s756 = smul.u32 3, %s46
        %s757 = smul.u32 3, %s46
        %s758 = smul.u32 3, %s46
        %s759 = smul.u32 3, %s46
        %v761 = vld [vmem:[%s632] sm:$0xff]
        %v762 = vld [vmem:[%s632 + $0x8] sm:$0xff]
        %v763 = vld [vmem:[%s632 + $0x10] sm:$0xff]
        %v764 = vpack.c.bf16 %v762, %v761
        %v765 = vpack.c.bf16 %v763, %v763
        %v766 = vld [vmem:[%s641] sm:$0xf]
        %v767 = vld [vmem:[%s641 + $0x4] sm:$0xf]
        %v768 = vld [vmem:[%s641 + $0x8] sm:$0xf]
        %v769 = vld [vmem:[%s641 + $0xc] sm:$0xf]
        %v770 = vld [vmem:[%s649] sm:$0x1]
        %v772 = vlaneseq
        %v773 = vshrl.u32 %v772, 7
        %v774 = vsub.s32 0, %v773
        %v775 = vrot.slane %v770, %v774
        %v781 = vunpack.c.l.b16 %v766
        %v782 = vunpack.c.l.b16 %v767
        %v783 = vunpack.c.l.b16 %v768
        %v784 = vunpack.c.l.b16 %v769
        %v785 = vpack.c.b16 %v782, %v781
        %v786 = vpack.c.b16 %v784, %v783
        %vm789 = vcmask 261120
        %v791 = vsel %vm789, %v764, 0
        %v794 = vsel %vm789, %v765, 0
        %796 = vmatprep.subr.bf16.mxu0 0
        %797 = vmatpush1.bf16.msra.mxu0 %v785
        %798 = vmatprep.subr.bf16.mxu0 0
        %799 = vmatpush1.bf16.msra.mxu0 %v786
        %800 = vmatprep.subr.bf16.mxu0 0
        %801 = vmatpush1.bf16.msra.mxu0 0
        %802 = vmatprep.subr.bf16.mxu0 0
        %803 = vmatpush1.bf16.msra.mxu0 0
        %804 = vmatprep.subr.bf16.mxu0 0
        %805 = vmatpush1.bf16.msra.mxu0 0
        %806 = vmatprep.subr.bf16.mxu0 0
        %807 = vmatpush1.bf16.msra.mxu0 0
        %808 = vmatprep.subr.bf16.mxu0 0
        %809 = vmatpush1.bf16.msra.mxu0 0
        %810 = vmatprep.subr.bf16.mxu0 0
        %811 = vmatpush1.bf16.msra.mxu0 0
        %812 = vmatprep.subr.bf16.mxu0 0
        %813 = vmatpush1.bf16.msra.mxu0 0
        %814 = vmatprep.subr.bf16.mxu0 0
        %815 = vmatpush1.bf16.msra.mxu0 0
        %816 = vmatprep.subr.bf16.mxu0 0
        %817 = vmatpush1.bf16.msra.mxu0 0
        %818 = vmatprep.subr.bf16.mxu0 0
        %819 = vmatpush1.bf16.msra.mxu0 0
        %820 = vmatprep.subr.bf16.mxu0 0
        %821 = vmatpush1.bf16.msra.mxu0 0
        %822 = vmatprep.subr.bf16.mxu0 0
        %823 = vmatpush1.bf16.msra.mxu0 0
        %824 = vmatprep.subr.bf16.mxu0 0
        %825 = vmatpush1.bf16.msra.mxu0 0
        %826 = vmatprep.subr.bf16.mxu0 0
        %827 = vmatpush1.bf16.msra.mxu0 0
        %828 = vmatprep.mubr.bf16.mxu0 0
        %829 = vmatmul.mubr.bf16.gmra.mrb[0].mxu0 %v791
        %v830 = vpop.f32.mrb[0].mxu0
        %v831 = vadd.f32 %v775, %v830
        %v832 = vpop.f32.mrb[0].mxu0
        %v833 = vpop.f32.mrb[0].mxu0
        %v834 = vadd.f32 %v775, %v833
        %v835 = vpop.f32.mrb[0].mxu0
        %836 = vmatprep.mubr.bf16.mxu0 0
        %837 = vmatmul.mubr.bf16.gmra.mrb[0].mxu0 %v794
        %v838 = vpop.f32.mrb[0].mxu0
        %v839 = vadd.f32 %v775, %v838
        %v840 = vpop.f32.mrb[0].mxu0
        %v841 = vpop.f32.mrb[0].mxu0
        %v842 = vpop.f32.mrb[0].mxu0
        %843 = vdwg.mxu0
        %v844 = vmax.f32 %v831, 0.0
        %v845 = vmax.f32 %v834, 0.0
        %v846 = vmax.f32 %v839, 0.0
        %v847 = vpack.c.bf16 %v845, %v844
        %v848 = vpack.c.bf16 %v846, %v846
        %v849 = vld [vmem:[%s658] sm:$0xf]
        %v850 = vld [vmem:[%s658 + $0x4] sm:$0xf]
        %v851 = vld [vmem:[%s658 + $0x8] sm:$0xf]
        %v852 = vld [vmem:[%s658 + $0xc] sm:$0xf]
        %v853 = vld [vmem:[%s666] sm:$0x1]
        %v855 = vlaneseq
        %v856 = vshrl.u32 %v855, 7
        %v857 = vsub.s32 0, %v856
        %v858 = vrot.slane %v853, %v857
        %v864 = vunpack.c.l.b16 %v849
        %v865 = vunpack.c.l.b16 %v850
        %v866 = vunpack.c.l.b16 %v851
        %v867 = vunpack.c.l.b16 %v852
        %v868 = vpack.c.b16 %v865, %v864
        %v869 = vpack.c.b16 %v867, %v866
        %v873 = vsel %vm789, %v847, 0
        %v876 = vsel %vm789, %v848, 0
        %878 = vmatprep.subr.bf16.mxu0 0
        %879 = vmatpush1.bf16.msra.mxu0 %v868
        %880 = vmatprep.subr.bf16.mxu0 0
        %881 = vmatpush1.bf16.msra.mxu0 %v869
        %882 = vmatprep.subr.bf16.mxu0 0
        %883 = vmatpush1.bf16.msra.mxu0 0
        %884 = vmatprep.subr.bf16.mxu0 0
        %885 = vmatpush1.bf16.msra.mxu0 0
        %886 = vmatprep.subr.bf16.mxu0 0
        %887 = vmatpush1.bf16.msra.mxu0 0
        %888 = vmatprep.subr.bf16.mxu0 0
        %889 = vmatpush1.bf16.msra.mxu0 0
        %890 = vmatprep.subr.bf16.mxu0 0
        %891 = vmatpush1.bf16.msra.mxu0 0
        %892 = vmatprep.subr.bf16.mxu0 0
        %893 = vmatpush1.bf16.msra.mxu0 0
        %894 = vmatprep.subr.bf16.mxu0 0
        %895 = vmatpush1.bf16.msra.mxu0 0
        %896 = vmatprep.subr.bf16.mxu0 0
        %897 = vmatpush1.bf16.msra.mxu0 0
        %898 = vmatprep.subr.bf16.mxu0 0
        %899 = vmatpush1.bf16.msra.mxu0 0
        %900 = vmatprep.subr.bf16.mxu0 0
        %901 = vmatpush1.bf16.msra.mxu0 0
        %902 = vmatprep.subr.bf16.mxu0 0
        %903 = vmatpush1.bf16.msra.mxu0 0
        %904 = vmatprep.subr.bf16.mxu0 0
        %905 = vmatpush1.bf16.msra.mxu0 0
        %906 = vmatprep.subr.bf16.mxu0 0
        %907 = vmatpush1.bf16.msra.mxu0 0
        %908 = vmatprep.subr.bf16.mxu0 0
        %909 = vmatpush1.bf16.msra.mxu0 0
        %910 = vmatprep.mubr.bf16.mxu0 0
        %911 = vmatmul.mubr.bf16.gmra.mrb[0].mxu0 %v873
        %v912 = vpop.f32.mrb[0].mxu0
        %v913 = vadd.f32 %v858, %v912
        %v914 = vpop.f32.mrb[0].mxu0
        %v915 = vpop.f32.mrb[0].mxu0
        %v916 = vadd.f32 %v858, %v915
        %v917 = vpop.f32.mrb[0].mxu0
        %918 = vmatprep.mubr.bf16.mxu0 0
        %919 = vmatmul.mubr.bf16.gmra.mrb[0].mxu0 %v876
        %v920 = vpop.f32.mrb[0].mxu0
        %v921 = vadd.f32 %v858, %v920
        %v922 = vpop.f32.mrb[0].mxu0
        %v923 = vpop.f32.mrb[0].mxu0
        %v924 = vpop.f32.mrb[0].mxu0
        %925 = vdwg.mxu0
        %v926 = vmax.f32 %v913, 0.0
        %v927 = vmax.f32 %v916, 0.0
        %v928 = vmax.f32 %v921, 0.0
        %v929 = vpack.c.bf16 %v927, %v926
        %v930 = vpack.c.bf16 %v928, %v928
        %v931 = vld [vmem:[%s675] sm:$0xf]
        %v932 = vld [vmem:[%s675 + $0x4] sm:$0xf]
        %v933 = vld [vmem:[%s675 + $0x8] sm:$0xf]
        %v934 = vld [vmem:[%s675 + $0xc] sm:$0xf]
        %v935 = vld [vmem:[%s683] sm:$0x1]
        %v937 = vlaneseq
        %v938 = vshrl.u32 %v937, 7
        %v939 = vsub.s32 0, %v938
        %v940 = vrot.slane %v935, %v939
        %v946 = vunpack.c.l.b16 %v931
        %v947 = vunpack.c.l.b16 %v932
        %v948 = vunpack.c.l.b16 %v933
        %v949 = vunpack.c.l.b16 %v934
        %v950 = vpack.c.b16 %v947, %v946
        %v951 = vpack.c.b16 %v949, %v948
        %v955 = vsel %vm789, %v929, 0
        %v958 = vsel %vm789, %v930, 0
        %960 = vmatprep.subr.bf16.mxu0 0
        %961 = vmatpush1.bf16.msra.mxu0 %v950
        %962 = vmatprep.subr.bf16.mxu0 0
        %963 = vmatpush1.bf16.msra.mxu0 %v951
        %964 = vmatprep.subr.bf16.mxu0 0
        %965 = vmatpush1.bf16.msra.mxu0 0
        %966 = vmatprep.subr.bf16.mxu0 0
        %967 = vmatpush1.bf16.msra.mxu0 0
        %968 = vmatprep.subr.bf16.mxu0 0
        %969 = vmatpush1.bf16.msra.mxu0 0
        %970 = vmatprep.subr.bf16.mxu0 0
        %971 = vmatpush1.bf16.msra.mxu0 0
        %972 = vmatprep.subr.bf16.mxu0 0
        %973 = vmatpush1.bf16.msra.mxu0 0
        %974 = vmatprep.subr.bf16.mxu0 0
        %975 = vmatpush1.bf16.msra.mxu0 0
        %976 = vmatprep.subr.bf16.mxu0 0
        %977 = vmatpush1.bf16.msra.mxu0 0
        %978 = vmatprep.subr.bf16.mxu0 0
        %979 = vmatpush1.bf16.msra.mxu0 0
        %980 = vmatprep.subr.bf16.mxu0 0
        %981 = vmatpush1.bf16.msra.mxu0 0
        %982 = vmatprep.subr.bf16.mxu0 0
        %983 = vmatpush1.bf16.msra.mxu0 0
        %984 = vmatprep.subr.bf16.mxu0 0
        %985 = vmatpush1.bf16.msra.mxu0 0
        %986 = vmatprep.subr.bf16.mxu0 0
        %987 = vmatpush1.bf16.msra.mxu0 0
        %988 = vmatprep.subr.bf16.mxu0 0
        %989 = vmatpush1.bf16.msra.mxu0 0
        %990 = vmatprep.subr.bf16.mxu0 0
        %991 = vmatpush1.bf16.msra.mxu0 0
        %992 = vmatprep.mubr.bf16.mxu0 0
        %993 = vmatmul.mubr.bf16.gmra.mrb[0].mxu0 %v955
        %v994 = vpop.f32.mrb[0].mxu0
        %v995 = vadd.f32 %v940, %v994
        %v996 = vpop.f32.mrb[0].mxu0
        %v997 = vpop.f32.mrb[0].mxu0
        %v998 = vadd.f32 %v940, %v997
        %v999 = vpop.f32.mrb[0].mxu0
        %1000 = vmatprep.mubr.bf16.mxu0 0
        %1001 = vmatmul.mubr.bf16.gmra.mrb[0].mxu0 %v958
        %v1002 = vpop.f32.mrb[0].mxu0
        %v1003 = vadd.f32 %v940, %v1002
        %v1004 = vpop.f32.mrb[0].mxu0
        %v1005 = vpop.f32.mrb[0].mxu0
        %v1006 = vpop.f32.mrb[0].mxu0
        %1007 = vdwg.mxu0
        %p1008 = scmp.eq.s32.totalorder %s47, 0
        // Predicated region
        $region105: #{tpu_custom_call.1} parent=71 // pred_check
          %p1009 = pneg %p1008
        $region106: #{tpu_custom_call.1} parent=71 // pred_check_branch
          %1011 = sbr.rel (%p1009) target = $region108
        $region107: #{tpu_custom_call.1} parent=71 // pred_region
          %v1012 = vxor.u32 %v995, 2147483648
          %v1013 = vxor.u32 %v998, 2147483648
          %v1014 = vxor.u32 %v1003, 2147483648
          %v1015 = vmul.f32 %v1012, 1.442695
          %v1016 = vpow.pop %v1015
          %v1017 = vmul.f32 %v1013, 1.442695
          %v1018 = vpow.pop %v1017
          %v1019 = vmul.f32 %v1014, 1.442695
          %v1020 = vpow.pop %v1019
          %v1021 = vadd.f32 %v1016, 1.0
          %v1022 = vadd.f32 %v1018, 1.0
          %v1023 = vadd.f32 %v1020, 1.0
          %v1024 = vrcp.pop %v1021
          %v1025 = vmul.f32 1.0, %v1024
          %v1026 = vrcp.pop %v1022
          %v1027 = vmul.f32 1.0, %v1026
          %v1028 = vrcp.pop %v1023
          %v1029 = vmul.f32 1.0, %v1028
          %1030 = vst [vmem:[#allocation16] sm:$0xff] %v1025
          %1031 = vst [vmem:[#allocation16 + $0x8] sm:$0xff] %v1027
          %1032 = vst [vmem:[#allocation16 + $0x10] sm:$0xff] %v1029
        $region108: #{tpu_custom_call.1} parent=71 // pred_fallthru
          _
        %p1033 = scmp.gt.s32.totalorder %s47, 0
        // Predicated region
        $region109: #{tpu_custom_call.1} parent=71 // pred_check
          %p1034 = pneg %p1033
        $region110: #{tpu_custom_call.1} parent=71 // pred_check_branch
          %1036 = sbr.rel (%p1034) target = $region112
        $region111: #{tpu_custom_call.1} parent=71 // pred_region
          %v1037 = vld [vmem:[#allocation16] sm:$0xff]
          %v1038 = vld [vmem:[#allocation16 + $0x8] sm:$0xff]
          %v1039 = vld [vmem:[#allocation16 + $0x10] sm:$0xff]
          %v1040 = vmax.f32 %v1037, 0.0
          %v1041 = vmax.f32 %v1038, 0.0
          %v1042 = vmax.f32 %v1039, 0.0
          %v1043 = vmin.f32 %v1040, 1.0
          %v1044 = vmin.f32 %v1041, 1.0
          %v1045 = vmin.f32 %v1042, 1.0
          %v1046 = vmax.f32 %v1043, 1e-05
          %v1047 = vmax.f32 %v1044, 1e-05
          %v1048 = vmax.f32 %v1045, 1e-05
          %v1049 = vsub.f32 1.0, %v1043
          %v1050 = vsub.f32 1.0, %v1044
          %v1051 = vsub.f32 1.0, %v1045
          %v1052 = vmax.f32 %v1049, 1e-05
          %v1053 = vmax.f32 %v1050, 1e-05
          %v1054 = vmax.f32 %v1051, 1e-05
          %v1055 = vlog2.pop %v1046
          %v1056 = vmul.f32 %v1055, 0.6931472
          %v1057 = vlog2.pop %v1047
          %v1058 = vmul.f32 %v1057, 0.6931472
          %v1059 = vlog2.pop %v1048
          %v1060 = vmul.f32 %v1059, 0.6931472
          %v1061 = vlog2.pop %v1052
          %v1062 = vmul.f32 %v1061, 0.6931472
          %v1063 = vlog2.pop %v1053
          %v1064 = vmul.f32 %v1063, 0.6931472
          %v1065 = vlog2.pop %v1054
          %v1066 = vmul.f32 %v1065, 0.6931472
          %v1067 = vsub.f32 %v1056, %v1062
          %v1068 = vsub.f32 %v1058, %v1064
          %v1069 = vsub.f32 %v1060, %v1066
          %v1070 = vadd.f32 %v995, %v1067
          %v1071 = vadd.f32 %v998, %v1068
          %v1072 = vadd.f32 %v1003, %v1069
          %v1073 = vxor.u32 %v1070, 2147483648
          %v1074 = vxor.u32 %v1071, 2147483648
          %v1075 = vxor.u32 %v1072, 2147483648
          %v1076 = vmul.f32 %v1073, 1.442695
          %v1077 = vpow.pop %v1076
          %v1078 = vmul.f32 %v1074, 1.442695
          %v1079 = vpow.pop %v1078
          %v1080 = vmul.f32 %v1075, 1.442695
          %v1081 = vpow.pop %v1080
          %v1082 = vadd.f32 %v1077, 1.0
          %v1083 = vadd.f32 %v1079, 1.0
          %v1084 = vadd.f32 %v1081, 1.0
          %v1085 = vrcp.pop %v1082
          %v1086 = vmul.f32 1.0, %v1085
          %v1087 = vrcp.pop %v1083
          %v1088 = vmul.f32 1.0, %v1087
          %v1089 = vrcp.pop %v1084
          %v1090 = vmul.f32 1.0, %v1089
          %1091 = vst [vmem:[#allocation16] sm:$0xff] %v1086
          %1092 = vst [vmem:[#allocation16 + $0x8] sm:$0xff] %v1088
          %1093 = vst [vmem:[#allocation16 + $0x10] sm:$0xff] %v1090
        $region112: #{tpu_custom_call.1} parent=71 // pred_fallthru
          _
        %p1094 = scmp.eq.s32.totalorder %s47, 2
        // Predicated region
        $region113: #{tpu_custom_call.1} parent=71 // pred_check
          %p1095 = pneg %p1094
        $region114: #{tpu_custom_call.1} parent=71 // pred_check_branch
          %1097 = sbr.rel (%p1095) target = $region116
        $region115: #{tpu_custom_call.1} parent=71 // pred_region
          %v1098 = vld [vmem:[#allocation14] sm:$0xff]
          %v1099 = vld [vmem:[#allocation14 + $0x8] sm:$0xff]
          %v1100 = vld [vmem:[#allocation14 + $0x10] sm:$0xff]
          %v1101 = vld [vmem:[#allocation14 + $0x18] sm:$0xff]
          %v1102 = vld [vmem:[%s8] sm:$0x3]
          %v1104 = vlaneseq
          %v1105 = vshrl.u32 %v1104, 7
          %v1106 = vsub.s32 0, %v1105
          %v1107 = vrot.slane %v1102, %v1106
          %v1108 = vlaneseq
          %v1109 = vshrl.u32 %v1108, 7
          %v1110 = vsub.s32 1, %v1109
          %v1111 = vrot.slane %v1102, %v1110
          %v1118 = vunpack.c.l.b16 %v1098
          %v1119 = vunpack.c.h.b16 %v1098
          %v1120 = vunpack.c.l.b16 %v1099
          %v1121 = vunpack.c.h.b16 %v1099
          %v1122 = vunpack.c.l.b16 %v1100
          %v1123 = vunpack.c.h.b16 %v1100
          %v1124 = vunpack.c.l.b16 %v1101
          %v1125 = vunpack.c.h.b16 %v1101
          %v1126 = vpack.c.b16 %v1120, %v1118
          %v1127 = vpack.c.b16 %v1121, %v1119
          %v1128 = vpack.c.b16 %v1124, %v1122
          %v1129 = vpack.c.b16 %v1125, %v1123
          %1134 = vmatprep.subr.bf16.mxu0 %v1127
          %1135 = vmatpush1.bf16.msra.mxu0 %v1126
          %1136 = vmatprep.subr.bf16.mxu0 %v1129
          %1137 = vmatpush1.bf16.msra.mxu0 %v1128
          %1138 = vmatprep.subr.bf16.mxu0 0
          %1139 = vmatpush1.bf16.msra.mxu0 0
          %1140 = vmatprep.subr.bf16.mxu0 0
          %1141 = vmatpush1.bf16.msra.mxu0 0
          %1142 = vmatprep.subr.bf16.mxu0 0
          %1143 = vmatpush1.bf16.msra.mxu0 0
          %1144 = vmatprep.subr.bf16.mxu0 0
          %1145 = vmatpush1.bf16.msra.mxu0 0
          %1146 = vmatprep.subr.bf16.mxu0 0
          %1147 = vmatpush1.bf16.msra.mxu0 0
          %1148 = vmatprep.subr.bf16.mxu0 0
          %1149 = vmatpush1.bf16.msra.mxu0 0
          %1150 = vmatprep.subr.bf16.mxu0 0
          %1151 = vmatpush1.bf16.msra.mxu0 0
          %1152 = vmatprep.subr.bf16.mxu0 0
          %1153 = vmatpush1.bf16.msra.mxu0 0
          %1154 = vmatprep.subr.bf16.mxu0 0
          %1155 = vmatpush1.bf16.msra.mxu0 0
          %1156 = vmatprep.subr.bf16.mxu0 0
          %1157 = vmatpush1.bf16.msra.mxu0 0
          %1158 = vmatprep.subr.bf16.mxu0 0
          %1159 = vmatpush1.bf16.msra.mxu0 0
          %1160 = vmatprep.subr.bf16.mxu0 0
          %1161 = vmatpush1.bf16.msra.mxu0 0
          %1162 = vmatprep.subr.bf16.mxu0 0
          %1163 = vmatpush1.bf16.msra.mxu0 0
          %1164 = vmatprep.subr.bf16.mxu0 0
          %1165 = vmatpush1.bf16.msra.mxu0 0
          %1166 = vmatprep.mubr.bf16.mxu0 0
          %1167 = vmatmul.mubr.bf16.gmra.mrb[0].mxu0 %v791
          %v1168 = vpop.f32.mrb[0].mxu0
          %v1169 = vadd.f32 %v1107, %v1168
          %v1170 = vpop.f32.mrb[0].mxu0
          %v1171 = vadd.f32 %v1111, %v1170
          %v1172 = vpop.f32.mrb[0].mxu0
          %v1173 = vadd.f32 %v1107, %v1172
          %v1174 = vpop.f32.mrb[0].mxu0
          %v1175 = vadd.f32 %v1111, %v1174
          %1176 = vmatprep.mubr.bf16.mxu0 0
          %1177 = vmatmul.mubr.bf16.gmra.mrb[0].mxu0 %v794
          %v1178 = vpop.f32.mrb[0].mxu0
          %v1179 = vadd.f32 %v1107, %v1178
          %v1180 = vpop.f32.mrb[0].mxu0
          %v1181 = vadd.f32 %v1111, %v1180
          %v1182 = vpop.f32.mrb[0].mxu0
          %v1183 = vpop.f32.mrb[0].mxu0
          %1184 = vdwg.mxu0
          %1185 = vst [vmem:[#allocation17] sm:$0xff] %v1169
          %1186 = vst [vmem:[#allocation17 + $0x8] sm:$0xff] %v1173
          %1187 = vst [vmem:[#allocation17 + $0x10] sm:$0xff] %v1179
          %v1188 = vmax.f32 %v1171, 0.0
          %v1189 = vmax.f32 %v1175, 0.0
          %v1190 = vmax.f32 %v1181, 0.0
          %v1191 = vpack.c.bf16 %v1189, %v1188
          %v1192 = vpack.c.bf16 %v1190, %v1190
          %v1193 = vld [vmem:[%s9] sm:$0xf]
          %v1194 = vld [vmem:[%s9 + $0x4] sm:$0xf]
          %v1195 = vld [vmem:[%s9 + $0x8] sm:$0xf]
          %v1196 = vld [vmem:[%s9 + $0xc] sm:$0xf]
          %v1197 = vld [vmem:[%s10] sm:$0x1]
          %v1199 = vlaneseq
          %v1200 = vshrl.u32 %v1199, 7
          %v1201 = vsub.s32 0, %v1200
          %v1202 = vrot.slane %v1197, %v1201
          %v1208 = vunpack.c.l.b16 %v1193
          %v1209 = vunpack.c.l.b16 %v1194
          %v1210 = vunpack.c.l.b16 %v1195
          %v1211 = vunpack.c.l.b16 %v1196
          %v1212 = vpack.c.b16 %v1209, %v1208
          %v1213 = vpack.c.b16 %v1211, %v1210
          %v1217 = vsel %vm789, %v1191, 0
          %v1220 = vsel %vm789, %v1192, 0
          %1222 = vmatprep.subr.bf16.mxu0 0
          %1223 = vmatpush1.bf16.msra.mxu0 %v1212
          %1224 = vmatprep.subr.bf16.mxu0 0
          %1225 = vmatpush1.bf16.msra.mxu0 %v1213
          %1226 = vmatprep.subr.bf16.mxu0 0
          %1227 = vmatpush1.bf16.msra.mxu0 0
          %1228 = vmatprep.subr.bf16.mxu0 0
          %1229 = vmatpush1.bf16.msra.mxu0 0
          %1230 = vmatprep.subr.bf16.mxu0 0
          %1231 = vmatpush1.bf16.msra.mxu0 0
          %1232 = vmatprep.subr.bf16.mxu0 0
          %1233 = vmatpush1.bf16.msra.mxu0 0
          %1234 = vmatprep.subr.bf16.mxu0 0
          %1235 = vmatpush1.bf16.msra.mxu0 0
          %1236 = vmatprep.subr.bf16.mxu0 0
          %1237 = vmatpush1.bf16.msra.mxu0 0
          %1238 = vmatprep.subr.bf16.mxu0 0
          %1239 = vmatpush1.bf16.msra.mxu0 0
          %1240 = vmatprep.subr.bf16.mxu0 0
          %1241 = vmatpush1.bf16.msra.mxu0 0
          %1242 = vmatprep.subr.bf16.mxu0 0
          %1243 = vmatpush1.bf16.msra.mxu0 0
          %1244 = vmatprep.subr.bf16.mxu0 0
          %1245 = vmatpush1.bf16.msra.mxu0 0
          %1246 = vmatprep.subr.bf16.mxu0 0
          %1247 = vmatpush1.bf16.msra.mxu0 0
          %1248 = vmatprep.subr.bf16.mxu0 0
          %1249 = vmatpush1.bf16.msra.mxu0 0
          %1250 = vmatprep.subr.bf16.mxu0 0
          %1251 = vmatpush1.bf16.msra.mxu0 0
          %1252 = vmatprep.subr.bf16.mxu0 0
          %1253 = vmatpush1.bf16.msra.mxu0 0
          %1254 = vmatprep.mubr.bf16.mxu0 0
          %1255 = vmatmul.mubr.bf16.gmra.mrb[0].mxu0 %v1217
          %v1256 = vpop.f32.mrb[0].mxu0
          %v1257 = vadd.f32 %v1202, %v1256
          %v1258 = vpop.f32.mrb[0].mxu0
          %v1259 = vpop.f32.mrb[0].mxu0
          %v1260 = vadd.f32 %v1202, %v1259
          %v1261 = vpop.f32.mrb[0].mxu0
          %1262 = vmatprep.mubr.bf16.mxu0 0
          %1263 = vmatmul.mubr.bf16.gmra.mrb[0].mxu0 %v1220
          %v1264 = vpop.f32.mrb[0].mxu0
          %v1265 = vadd.f32 %v1202, %v1264
          %v1266 = vpop.f32.mrb[0].mxu0
          %v1267 = vpop.f32.mrb[0].mxu0
          %v1268 = vpop.f32.mrb[0].mxu0
          %1269 = vdwg.mxu0
          %v1270 = vmax.f32 %v1257, 0.0
          %v1271 = vmax.f32 %v1260, 0.0
          %v1272 = vmax.f32 %v1265, 0.0
          %v1273 = vpack.c.bf16 %v1271, %v1270
          %v1274 = vpack.c.bf16 %v1272, %v1272
          %v1275 = vld [vmem:[%s11] sm:$0xf]
          %v1276 = vld [vmem:[%s11 + $0x4] sm:$0xf]
          %v1277 = vld [vmem:[%s11 + $0x8] sm:$0xf]
          %v1278 = vld [vmem:[%s11 + $0xc] sm:$0xf]
          %v1279 = vld [vmem:[%s12] sm:$0x1]
          %v1281 = vlaneseq
          %v1282 = vshrl.u32 %v1281, 7
          %v1283 = vsub.s32 0, %v1282
          %v1284 = vrot.slane %v1279, %v1283
          %v1290 = vunpack.c.l.b16 %v1275
          %v1291 = vunpack.c.l.b16 %v1276
          %v1292 = vunpack.c.l.b16 %v1277
          %v1293 = vunpack.c.l.b16 %v1278
          %v1294 = vpack.c.b16 %v1291, %v1290
          %v1295 = vpack.c.b16 %v1293, %v1292
          %v1299 = vsel %vm789, %v1273, 0
          %v1302 = vsel %vm789, %v1274, 0
          %1304 = vmatprep.subr.bf16.mxu0 0
          %1305 = vmatpush1.bf16.msra.mxu0 %v1294
          %1306 = vmatprep.subr.bf16.mxu0 0
          %1307 = vmatpush1.bf16.msra.mxu0 %v1295
          %1308 = vmatprep.subr.bf16.mxu0 0
          %1309 = vmatpush1.bf16.msra.mxu0 0
          %1310 = vmatprep.subr.bf16.mxu0 0
          %1311 = vmatpush1.bf16.msra.mxu0 0
          %1312 = vmatprep.subr.bf16.mxu0 0
          %1313 = vmatpush1.bf16.msra.mxu0 0
          %1314 = vmatprep.subr.bf16.mxu0 0
          %1315 = vmatpush1.bf16.msra.mxu0 0
          %1316 = vmatprep.subr.bf16.mxu0 0
          %1317 = vmatpush1.bf16.msra.mxu0 0
          %1318 = vmatprep.subr.bf16.mxu0 0
          %1319 = vmatpush1.bf16.msra.mxu0 0
          %1320 = vmatprep.subr.bf16.mxu0 0
          %1321 = vmatpush1.bf16.msra.mxu0 0
          %1322 = vmatprep.subr.bf16.mxu0 0
          %1323 = vmatpush1.bf16.msra.mxu0 0
          %1324 = vmatprep.subr.bf16.mxu0 0
          %1325 = vmatpush1.bf16.msra.mxu0 0
          %1326 = vmatprep.subr.bf16.mxu0 0
          %1327 = vmatpush1.bf16.msra.mxu0 0
          %1328 = vmatprep.subr.bf16.mxu0 0
          %1329 = vmatpush1.bf16.msra.mxu0 0
          %1330 = vmatprep.subr.bf16.mxu0 0
          %1331 = vmatpush1.bf16.msra.mxu0 0
          %1332 = vmatprep.subr.bf16.mxu0 0
          %1333 = vmatpush1.bf16.msra.mxu0 0
          %1334 = vmatprep.subr.bf16.mxu0 0
          %1335 = vmatpush1.bf16.msra.mxu0 0
          %1336 = vmatprep.mubr.bf16.mxu0 0
          %1337 = vmatmul.mubr.bf16.gmra.mrb[0].mxu0 %v1299
          %v1338 = vpop.f32.mrb[0].mxu0
          %v1339 = vadd.f32 %v1284, %v1338
          %v1340 = vpop.f32.mrb[0].mxu0
          %v1341 = vpop.f32.mrb[0].mxu0
          %v1342 = vadd.f32 %v1284, %v1341
          %v1343 = vpop.f32.mrb[0].mxu0
          %1344 = vmatprep.mubr.bf16.mxu0 0
          %1345 = vmatmul.mubr.bf16.gmra.mrb[0].mxu0 %v1302
          %v1346 = vpop.f32.mrb[0].mxu0
          %v1347 = vadd.f32 %v1284, %v1346
          %v1348 = vpop.f32.mrb[0].mxu0
          %v1349 = vpop.f32.mrb[0].mxu0
          %v1350 = vpop.f32.mrb[0].mxu0
          %1351 = vdwg.mxu0
          %v1352 = vxor.u32 %v1339, 2147483648
          %v1353 = vxor.u32 %v1342, 2147483648
          %v1354 = vxor.u32 %v1347, 2147483648
          %v1355 = vmul.f32 %v1352, 1.442695
          %v1356 = vpow.pop %v1355
          %v1357 = vmul.f32 %v1353, 1.442695
          %v1358 = vpow.pop %v1357
          %v1359 = vmul.f32 %v1354, 1.442695
          %v1360 = vpow.pop %v1359
          %v1361 = vadd.f32 %v1356, 1.0
          %v1362 = vadd.f32 %v1358, 1.0
          %v1363 = vadd.f32 %v1360, 1.0
          %v1364 = vrcp.pop %v1361
          %v1365 = vmul.f32 1.0, %v1364
          %v1366 = vrcp.pop %v1362
          %v1367 = vmul.f32 1.0, %v1366
          %v1368 = vrcp.pop %v1363
          %v1369 = vmul.f32 1.0, %v1368
          %1370 = vst [vmem:[#allocation19] sm:$0xff] %v1365
          %1371 = vst [vmem:[#allocation19 + $0x8] sm:$0xff] %v1367
          %1372 = vst [vmem:[#allocation19 + $0x10] sm:$0xff] %v1369
        $region116: #{tpu_custom_call.1} parent=71 // pred_fallthru
          _
        // Predicated region
        $region117: #{tpu_custom_call.1} parent=71 // pred_check
          %p1373 = pneg %p382
        $region118: #{tpu_custom_call.1} parent=71 // pred_check_branch
          %1375 = sbr.rel (%p1373) target = $region120
        $region119: #{tpu_custom_call.1} parent=71 // pred_region
          %s1376 = smul.u32 3, %s46
          %s1378 = ssub.s32 384, 384
          %1379 = vsyncadd [#allocation4], %s1378
          %s1380 = smul.addr %s1376, 128
          %s1381 = scalar_lea.hbm %s13, %s1380
          %s1382 = sshll.u32 [#allocation16], 4
          %s1383 = int_to_ptr.vmem [resolvable:$true] %s1382
          %1388 = dma.vmem_to_hbm [thread:$0]  %s1383, 384, %s1381, [#allocation4], 128, 128, 8
        $region120: #{tpu_custom_call.1} parent=71 // pred_fallthru
          _
        // Predicated region
        $region121: #{tpu_custom_call.1} parent=71 // pred_check
          %p1389 = pneg %p408
        $region122: #{tpu_custom_call.1} parent=71 // pred_check_branch
          %1391 = sbr.rel (%p1389) target = $region124
        $region123: #{tpu_custom_call.1} parent=71 // pred_region
          %s1392 = smul.u32 3, %s46
          %s1394 = ssub.s32 384, 384
          %1395 = vsyncadd [#allocation18], %s1394
          %s1396 = smul.addr %s1392, 128
          %s1397 = scalar_lea.hbm %s14, %s1396
          %s1398 = sshll.u32 [#allocation17], 4
          %s1399 = int_to_ptr.vmem [resolvable:$true] %s1398
          %1404 = dma.vmem_to_hbm [thread:$0]  %s1399, 384, %s1397, [#allocation18], 128, 128, 8
        $region124: #{tpu_custom_call.1} parent=71 // pred_fallthru
          _
        // Predicated region
        $region125: #{tpu_custom_call.1} parent=71 // pred_check
          %p1405 = pneg %p434
        $region126: #{tpu_custom_call.1} parent=71 // pred_check_branch
          %1407 = sbr.rel (%p1405) target = $region128
        $region127: #{tpu_custom_call.1} parent=71 // pred_region
          %s1408 = smul.u32 3, %s46
          %s1410 = ssub.s32 384, 384
          %1411 = vsyncadd [#allocation18], %s1410
          %s1412 = smul.addr %s1408, 128
          %s1413 = scalar_lea.hbm %s15, %s1412
          %s1414 = sshll.u32 [#allocation19], 4
          %s1415 = int_to_ptr.vmem [resolvable:$true] %s1414
          %1420 = dma.vmem_to_hbm [thread:$0]  %s1415, 384, %s1413, [#allocation18], 128, 128, 8
        $region128: #{tpu_custom_call.1} parent=71 // pred_fallthru
          _
        // Predicated region
        $region129: #{tpu_custom_call.1} parent=71 // pred_check
          %p1421 = pneg %p382
        $region130: #{tpu_custom_call.1} parent=71 // pred_check_branch
          %1423 = sbr.rel (%p1421) target = $region132
        $region131: #{tpu_custom_call.1} parent=71 // pred_region
          %1424 = dma.done [#allocation4], 384
        $region132: #{tpu_custom_call.1} parent=71 // pred_fallthru
          _
        // Predicated region
        $region133: #{tpu_custom_call.1} parent=71 // pred_check
          %p1425 = pneg %p408
        $region134: #{tpu_custom_call.1} parent=71 // pred_check_branch
          %1427 = sbr.rel (%p1425) target = $region136
        $region135: #{tpu_custom_call.1} parent=71 // pred_region
          %1428 = dma.done [#allocation18], 384
        $region136: #{tpu_custom_call.1} parent=71 // pred_fallthru
          _
        // Predicated region
        $region137: #{tpu_custom_call.1} parent=71 // pred_check
          %p1429 = pneg %p434
        $region138: #{tpu_custom_call.1} parent=71 // pred_check_branch
          %1431 = sbr.rel (%p1429) target = $region140
        $region139: #{tpu_custom_call.1} parent=71 // pred_region
          %1432 = dma.done [#allocation18], 384
        $region140: #{tpu_custom_call.1} parent=71 // pred_fallthru
          _
      $region72: #{tpu_custom_call.1} parent=5 // pred_fallthru
        _
      %p1433 = scmp.le.s32.totalorder 2, %s37
      // Predicated region
      $region141: #{tpu_custom_call.1} parent=5 // pred_check
        %p1434 = pneg %p1433
      $region142: #{tpu_custom_call.1} parent=5 // pred_check_branch
        %1436 = sbr.rel (%p1434) target = $region144
      $region143: #{tpu_custom_call.1} parent=5 // pred_region
        %s1437 = ssub.s32 %s37, 2
      $region144: #{tpu_custom_call.1} parent=5 // pred_fallthru
        _
    $region6: #{tpu_custom_call.1} parent=1 // loop_footer
      %s41 = sadd.s32 1, %s37
    $region7: #{tpu_custom_call.1} parent=1 // loop_footer_branch
      %36 = sbr.rel target = $region3
    $region8: #{tpu_custom_call.1} parent=1 // loop_exit
      _
    %1438 = vsyncpa [#allocation3], 1
    %s1439 = scalar_lea.sflag [#allocation3], 1
    %1440 = vsyncpa %s1439, 1
    %1441 = vsyncpa [#allocation6], 1
    %s1442 = scalar_lea.sflag [#allocation6], 1
    %1443 = vsyncpa %s1442, 1
    %1444 = vsyncpa [#allocation9], 1
    %s1445 = scalar_lea.sflag [#allocation9], 1
    %1446 = vsyncpa %s1445, 1
    %1447 = vsyncpa [#allocation12], 1
    %s1448 = scalar_lea.sflag [#allocation12], 1
    %1449 = vsyncpa %s1448, 1
    %1450 = vsyncpa [#allocation15], 1
    %1451 = vsyncpa [#allocation4], 1
    %s1452 = scalar_lea.sflag [#allocation4], 1
    %1453 = vsyncpa %s1452, 1
    %1454 = vsyncpa [#allocation18], 1

</llo_original>
